<compile_context>
chip_gen: v6e
topology: v6e:2x2x1
jax: 0.10.0
libtpu: 0.0.40
codegen_flags: <defaults>
</compile_context>

<pallas_src>
import functools
import math

import jax
import jax.numpy as jnp
from jax import lax
from jax.experimental import pallas as pl
from jax.experimental.pallas import tpu as pltpu


_IN_PAD = 16   # first MLP layer in-dims (5 / 3 channels) are zero-padded to this many columns
# LineTR's transformer sublayers follow the jadore801120 implementation (LayerNorm eps=1e-6).
# TODO(synk): switch to 1e-5 if the reference MultiHeadAttention/FeedForward use torch default.
_LN_EPS = 1e-6


def _round_up(x, m):
    return (x + m - 1) // m * m


def _weight_layout(feature_dim, mlp_layers, d_inner):
    """Row layout (name -> (row_off, rows, cols)) of the packed bf16 MXU-weight slab."""
    D = feature_dim
    ch = [_IN_PAD] + list(mlp_layers) + [D]
    entries = []
    for i in range(1, len(ch)):
        entries.append((f"lw{i}", ch[i - 1], ch[i]))          # line positional MLP
    for i in range(1, len(ch)):
        entries.append((f"ww{i}", ch[i - 1], ch[i]))          # word positional MLP
    entries += [("wq", D, D), ("wkv", D, 2 * D), ("wo", D, D),
                ("wf1", D, d_inner), ("wf2", d_inner, D)]
    layout, off = {}, 0
    for name, rows, cols in entries:
        assert rows % 16 == 0, f"{name}: rows must be a multiple of 16 (bf16 sublane tile)"
        layout[name] = (off, rows, cols)
        off += rows
    width = max(c for _, _, c in layout.values())
    return layout, off, width


def _bias_layout(feature_dim, mlp_layers, d_inner):
    """Row layout (name -> (row, cols)) of the packed f32 bias / LayerNorm / cls slab."""
    D = feature_dim
    ch = list(mlp_layers) + [D]
    entries = [(f"lb{i + 1}", c) for i, c in enumerate(ch)]
    entries += [(f"wb{i + 1}", c) for i, c in enumerate(ch)]
    entries += [("ln1g", D), ("ln1b", D), ("bf1", d_inner), ("bf2", D),
                ("ln2g", D), ("ln2b", D), ("cls", D)]
    layout = {name: (row, cols) for row, (name, cols) in enumerate(entries)}
    return layout, _round_up(len(entries), 8), max(c for _, c in entries)


# ----------------------------------------------------------------------------
# Fused KeylineEncoder kernel (one invocation processes every sequence)
# ----------------------------------------------------------------------------
def _keyline_kernel(line_ref, word_ref, desc_ref, bias_ref, w_ref, b_ref, out_ref, *,
                    n_seq, t_len, n_heads, d_k, d_model, n_mlp, w_idx, b_idx):
    f32, bf16 = jnp.float32, jnp.bfloat16
    D = d_model
    M = n_seq * t_len

    def W(name):                                  # static slice out of the bf16 weight slab
        off, rows, cols = w_idx[name]
        return w_ref[off:off + rows, 0:cols]

    def Bvec(name):                               # static single-row slice of the f32 slab
        row, cols = b_idx[name]
        return b_ref[row:row + 1, 0:cols]

    def mlp(x, prefix):
        # Conv1d(k=1)(+BN folded)+ReLU stack == row-wise matmuls (bf16 MXU, f32 accumulate).
        h = x
        for i in range(1, n_mlp + 1):
            h = jnp.dot(h.astype(bf16), W(f"{prefix}w{i}"),
                        preferred_element_type=f32) + Bvec(f"{prefix}b{i}")
            if i < n_mlp:
                h = jnp.maximum(h, 0.0)
        return h

    # ---- positional MLPs ----
    line_pos = mlp(line_ref[...], "l")            # (n_seq, D)
    word_pos = mlp(word_ref[...], "w")            # (M, D); cls-slot rows are masked below

    # ---- token assembly: x[n,0,:] = cls token, x[n,t>0,:] = desc + word_pos ----
    cls_row = Bvec("cls")                                                   # (1, D)
    t_idx = lax.broadcasted_iota(jnp.int32, (n_seq, t_len, 1), 1)
    x3 = desc_ref[...].reshape(n_seq, t_len, D) + jnp.where(
        t_idx > 0, word_pos.reshape(n_seq, t_len, D), cls_row.reshape(1, 1, D))
    x = x3.reshape(M, D)
    x_bf = x.astype(bf16)

    # ---- fused K/V projection: ONE wide MXU push over all token rows ----
    kv = jnp.dot(x_bf, W("wkv"), preferred_element_type=f32)                # (M, 2D)
    k = kv[:, 0:D]
    v = kv[:, D:2 * D]

    # ---- Q from the cls rows only (all cls rows are identical); 1/sqrt(d_k) folded in Wq ----
    x_cls = jnp.broadcast_to(cls_row, (n_seq, D))                           # MHA residual too
    q = jnp.dot(x_cls.astype(bf16), W("wq"), preferred_element_type=f32)    # (n_seq, D)
    q_tok = jnp.broadcast_to(q.reshape(n_seq, 1, D), (n_seq, t_len, D)).reshape(M, D)

    # ---- per-head scores without a head loop: lane product + head-block-sum matmul ----
    d_iota = lax.broadcasted_iota(jnp.int32, (D, n_heads), 0)
    h_iota = lax.broadcasted_iota(jnp.int32, (D, n_heads), 1)
    seg = jnp.logical_and(d_iota >= h_iota * d_k,
                          d_iota < (h_iota + 1) * d_k).astype(f32)          # (D, H)
    scores = jnp.dot(q_tok * k, seg, preferred_element_type=f32)            # (M, H)
    s3 = scores.reshape(n_seq, t_len, n_heads) + bias_ref[...]              # + key-mask bias

    # ---- softmax over keys (axis 1); exact division for parity with torch ----
    m = jnp.max(s3, axis=1, keepdims=True)
    p = jnp.exp(s3 - m)
    p = p / jnp.sum(p, axis=1, keepdims=True)                               # (n_seq, T, H)

    # ---- PV: expand per-head probs back to D lanes, multiply by V, reduce over keys ----
    hh_iota = lax.broadcasted_iota(jnp.int32, (n_heads, D), 0)
    dd_iota = lax.broadcasted_iota(jnp.int32, (n_heads, D), 1)
    seg_t = jnp.logical_and(dd_iota >= hh_iota * d_k,
                            dd_iota < (hh_iota + 1) * d_k).astype(f32)      # (H, D)
    p_exp = jnp.dot(p.reshape(M, n_heads), seg_t, preferred_element_type=f32)   # (M, D)
    o = jnp.sum((p_exp * v).reshape(n_seq, t_len, D), axis=1)               # (n_seq, D)

    # ---- output projection fused across heads; residual folded into the accumulator ----
    att = x_cls + jnp.dot(o.astype(bf16), W("wo"), preferred_element_type=f32)

    # ---- post-LN transformer tail on cls rows only (exact: only enc_output[:,:,0,:] used) ----
    def layernorm(z, g, b):
        mu = jnp.mean(z, axis=-1, keepdims=True)
        var = jnp.mean(jnp.square(z - mu), axis=-1, keepdims=True)
        return (z - mu) * lax.rsqrt(var + _LN_EPS) * g + b

    y1 = layernorm(att, Bvec("ln1g"), Bvec("ln1b"))
    hmid = jnp.maximum(
        jnp.dot(y1.astype(bf16), W("wf1"), preferred_element_type=f32) + Bvec("bf1"), 0.0)
    ffn = jnp.dot(hmid.astype(bf16), W("wf2"), preferred_element_type=f32) + Bvec("bf2")
    y2 = layernorm(ffn + y1, Bvec("ln2g"), Bvec("ln2b"))

    # sentence rows: klines_pos + cls-token encoder output
    out_ref[...] = line_pos + y2


# ----------------------------------------------------------------------------
# Forward wrapper (cheap input plumbing in plain JAX, one pallas_call for the model)
# ----------------------------------------------------------------------------
def keyline_encoder_forward(params, klines, resp, angle, pnt, desc, score, mask):
    B, L, Wn, D = desc.shape
    T = Wn + 1
    N = B * L
    M = N * T
    n_heads = params["n_heads"]
    mlp_layers = list(params["mlp_layers"])
    d_inner = params["d_inner"]
    d_k = D // n_heads
    f32 = jnp.float32

    w_idx, _, _ = _weight_layout(D, mlp_layers, d_inner)
    b_idx, _, _ = _bias_layout(D, mlp_layers, d_inner)

    # LinePositionalEncoder input: channels (mid_x, mid_y, resp, angle0, angle1), zero-padded.
    mid = (klines[:, :, 0] + klines[:, :, 1]) * 0.5                         # (B, L, 2)
    line_in = jnp.concatenate([mid, resp, angle], axis=-1).reshape(N, -1).astype(f32)
    line_in = jnp.pad(line_in, ((0, 0), (0, _IN_PAD - line_in.shape[1])))   # (N, 16)

    # WordPositionalEncoder input per token slot (row n*T+0 = cls slot, zeroed & masked in-kernel).
    word_feat = jnp.concatenate([pnt, score], axis=-1).astype(f32).reshape(N, Wn, -1)
    word_tok = jnp.pad(word_feat, ((0, 0), (1, 0), (0, 0))).reshape(M, -1)
    word_tok = jnp.pad(word_tok, ((0, 0), (0, _IN_PAD - word_tok.shape[1])))  # (M, 16)

    # Descriptor tokens with a zero cls slot (the cls token itself is added in-kernel).
    desc_tok = jnp.pad(desc.reshape(N, Wn, D).astype(f32), ((0, 0), (1, 0), (0, 0))).reshape(M, D)

    # Additive key mask: 0 where attend, -1e9 where masked (same softmax result as masked_fill).
    bias = ((mask.reshape(N, T).astype(f32) - 1.0) * 1e9).reshape(N, T, 1)

    kernel = functools.partial(
        _keyline_kernel, n_seq=N, t_len=T, n_heads=n_heads, d_k=d_k,
        d_model=D, n_mlp=len(mlp_layers) + 1, w_idx=w_idx, b_idx=b_idx)

    def full_spec(a):
        return pl.BlockSpec(a.shape, lambda i, nd=a.ndim: (0,) * nd)

    args = (line_in, word_tok, desc_tok, bias, params["w_slab"], params["b_slab"])
    # Single grid step: v5e/v6e are single-TensorCore, and at this size the kernel is
    # latency-bound, so splitting the grid only adds per-step and DMA overhead.
    # TODO(synk): evaluate a 2-way core split (pl.core_map / CORE_PARALLEL) on v7x only.
    sentence = pl.pallas_call(
        kernel,
        out_shape=jax.ShapeDtypeStruct((N, D), f32),
        grid=(1,),
        in_specs=[full_spec(a) for a in args],
        out_specs=pl.BlockSpec((N, D), lambda i: (0, 0)),
        compiler_params=pltpu.CompilerParams(dimension_semantics=("arbitrary",)),
    )(*args)

    # torch returns (B, D, L): klines_pos + enc_output[:, :, 0, :].transpose(1, 2)
    return jnp.transpose(sentence.reshape(B, L, D), (0, 2, 1))


# ----------------------------------------------------------------------------
# Deterministic parameter init (matching module __init__ shapes) + slab packing
# ----------------------------------------------------------------------------
def init_params(key, feature_dim, mlp_layers, n_heads, n_att_layers, d_inner):
    assert n_att_layers >= 1
    D = feature_dim
    d_k = D // n_heads
    bn_fold = 1.0 / math.sqrt(1.0 + 1e-5)  # eval-mode BatchNorm1d with default running stats
    # TODO(synk): for a trained checkpoint fold the real running_mean/var/gamma/beta instead.

    def conv_stack(key, in_ch, hidden):
        # MLP([in_ch] + hidden + [D]); BN folded after every layer except the last; last bias = 0.
        chans = [in_ch] + list(hidden) + [D]
        ws, bs = [], []
        for i in range(1, len(chans)):
            key, k1, k2 = jax.random.split(key, 3)
            w = jax.random.normal(k1, (chans[i - 1], chans[i]), jnp.float32) * 0.2
            b = jax.random.normal(k2, (1, chans[i]), jnp.float32) * 0.1
            if i < len(chans) - 1:
                w, b = w * bn_fold, b * bn_fold
            else:
                b = jnp.zeros_like(b)                 # nn.init.constant_(encoder[-1].bias, 0.0)
            if i == 1:                                # zero-pad tiny in-channel dim (exact)
                w = jnp.pad(w, ((0, _IN_PAD - chans[0]), (0, 0)))
            ws.append(w)
            bs.append(b)
        return key, ws, bs

    key, line_ws, line_bs = conv_stack(key, 5, mlp_layers)
    key, word_ws, word_bs = conv_stack(key, 3, mlp_layers)

    # n_att_layers layers are constructed, but the PyTorch loop feeds the SAME `desc` to every
    # layer and only the last `enc_output` reaches `sentence`; only the last layer is packed/run.
    for _ in range(n_att_layers):
        key, *ks = jax.random.split(key, 9)
        wq = jax.random.normal(ks[0], (D, D), jnp.float32) / math.sqrt(D)
        wk = jax.random.normal(ks[1], (D, D), jnp.float32) / math.sqrt(D)
        wv = jax.random.normal(ks[2], (D, D), jnp.float32) / math.sqrt(D)
        wo = jax.random.normal(ks[3], (D, D), jnp.float32) / math.sqrt(D)
        wf1 = jax.random.normal(ks[4], (D, d_inner), jnp.float32) / math.sqrt(D)
        bf1 = jax.random.normal(ks[5], (1, d_inner), jnp.float32) * 0.05
        wf2 = jax.random.normal(ks[6], (d_inner, D), jnp.float32) / math.sqrt(d_inner)
        bf2 = jax.random.normal(ks[7], (1, D), jnp.float32) * 0.05
    key, kc = jax.random.split(key)
    cls_token = jax.random.normal(kc, (1, D), jnp.float32)

    # ---- pack the bf16 MXU-weight slab ----
    w_idx, w_rows, w_width = _weight_layout(D, mlp_layers, d_inner)
    w_slab = jnp.zeros((w_rows, w_width), jnp.float32)

    def put_w(slab, name, w):
        off, rows, cols = w_idx[name]
        assert w.shape == (rows, cols), (name, w.shape, (rows, cols))
        return slab.at[off:off + rows, 0:cols].set(w)

    for i, w in enumerate(line_ws):
        w_slab = put_w(w_slab, f"lw{i + 1}", w)
    for i, w in enumerate(word_ws):
        w_slab = put_w(w_slab, f"ww{i + 1}", w)
    w_slab = put_w(w_slab, "wq", wq / math.sqrt(d_k))            # fold 1/sqrt(d_k) into Wq
    w_slab = put_w(w_slab, "wkv", jnp.concatenate([wk, wv], axis=1))
    w_slab = put_w(w_slab, "wo", wo)
    w_slab = put_w(w_slab, "wf1", wf1)
    w_slab = put_w(w_slab, "wf2", wf2)
    w_slab = w_slab.astype(jnp.bfloat16)

    # ---- pack the f32 bias / LayerNorm / cls slab ----
    b_idx, b_rows, b_width = _bias_layout(D, mlp_layers, d_inner)
    b_slab = jnp.zeros((b_rows, b_width), jnp.float32)

    def put_b(slab, name, v):
        row, cols = b_idx[name]
        assert v.shape == (1, cols), (name, v.shape, cols)
        return slab.at[row:row + 1, 0:cols].set(v)

    for i, b in enumerate(line_bs):
        b_slab = put_b(b_slab, f"lb{i + 1}", b)
    for i, b in enumerate(word_bs):
        b_slab = put_b(b_slab, f"wb{i + 1}", b)
    b_slab = put_b(b_slab, "ln1g", jnp.ones((1, D), jnp.float32))
    b_slab = put_b(b_slab, "ln1b", jnp.zeros((1, D), jnp.float32))
    b_slab = put_b(b_slab, "bf1", bf1)
    b_slab = put_b(b_slab, "bf2", bf2)
    b_slab = put_b(b_slab, "ln2g", jnp.ones((1, D), jnp.float32))
    b_slab = put_b(b_slab, "ln2b", jnp.zeros((1, D), jnp.float32))
    b_slab = put_b(b_slab, "cls", cls_token)

    return {"w_slab": w_slab, "b_slab": b_slab, "n_heads": n_heads,
            "mlp_layers": tuple(mlp_layers), "d_inner": d_inner}


if __name__ == "__main__":
    B, L, Wn, D = 2, 8, 7, 32          # batch, n_klines, n_words, feature_dim
    N_HEADS, N_ATT_LAYERS, D_INNER = 4, 2, 64
    MLP_LAYERS = [16, 32]
    T = Wn + 1

    key = jax.random.PRNGKey(0)
    key, kp = jax.random.split(key)
    params = init_params(kp, D, MLP_LAYERS, N_HEADS, N_ATT_LAYERS, D_INNER)

    key, k1, k2, k3, k4, k5, k6 = jax.random.split(key, 7)
    klines = jax.random.uniform(k1, (B, L, 2, 2), jnp.float32)    # two endpoints (x, y)
    resp = jax.random.uniform(k2, (B, L, 1), jnp.float32)
    angle = jax.random.uniform(k3, (B, L, 2), jnp.float32)
    pnt = jax.random.uniform(k4, (B, L, Wn, 2), jnp.float32)      # word positions
    score = jax.random.uniform(k5, (B, L, Wn, 1), jnp.float32)
    desc = jax.random.normal(k6, (B, L, Wn, D), jnp.float32)

    # key mask over tokens (cls + words); 1 = attend, 0 = masked. Last two words masked.
    mask = jnp.ones((B, L, 1, T), jnp.float32).at[:, :, :, T - 2:].set(0.0)

    sentence = keyline_encoder_forward(params, klines, resp, angle, pnt, desc, score, mask)
    jax.block_until_ready(sentence)
    assert sentence.shape == (B, D, L), sentence.shape
    print("KERNEL_OK")
</pallas_src>

<mosaic_0001>
module attributes {stable_mosaic.version = 11 : i64} {
  func.func @_keyline_kernel(%arg0: i32, %arg1: memref<16x16xf32, #tpu.memory_space<vmem>>, %arg2: memref<128x16xf32, #tpu.memory_space<vmem>>, %arg3: memref<128x32xf32, #tpu.memory_space<vmem>>, %arg4: memref<16x8x1xf32, #tpu.memory_space<vmem>>, %arg5: memref<320x64xbf16, #tpu.memory_space<vmem>>, %arg6: memref<16x64xf32, #tpu.memory_space<vmem>>, %arg7: memref<16x32xf32, #tpu.memory_space<vmem>>) attributes {dimension_semantics = [#tpu.dimension_semantics<arbitrary>], iteration_bounds = array<i64: 1>, scalar_prefetch = 0 : i64, scratch_operands = 0 : i64, tpu.core_type = #tpu.core_type<tc>, window_params = [{pipeline_mode = #tpu.pipeline_mode<synchronous>, transform_indices = @transform_0, window_bounds = array<i64: 16, 16>}, {pipeline_mode = #tpu.pipeline_mode<synchronous>, transform_indices = @transform_1, window_bounds = array<i64: 128, 16>}, {pipeline_mode = #tpu.pipeline_mode<synchronous>, transform_indices = @transform_2, window_bounds = array<i64: 128, 32>}, {pipeline_mode = #tpu.pipeline_mode<synchronous>, transform_indices = @transform_3, window_bounds = array<i64: 16, 8, 1>}, {pipeline_mode = #tpu.pipeline_mode<synchronous>, transform_indices = @transform_4, window_bounds = array<i64: 320, 64>}, {pipeline_mode = #tpu.pipeline_mode<synchronous>, transform_indices = @transform_5, window_bounds = array<i64: 16, 64>}, {pipeline_mode = #tpu.pipeline_mode<synchronous>, transform_indices = @transform_6, window_bounds = array<i64: 16, 32>}]} {
    %c0 = arith.constant 0 : index
    %c0_0 = arith.constant 0 : index
    %0 = vector.load %arg1[%c0, %c0_0] : memref<16x16xf32, #tpu.memory_space<vmem>>, vector<16x16xf32>
    %1 = arith.truncf %0 : vector<16x16xf32> to vector<16x16xbf16>
    %c0_1 = arith.constant 0 : index
    %c0_2 = arith.constant 0 : index
    %2 = vector.load %arg5[%c0_1, %c0_2] : memref<320x64xbf16, #tpu.memory_space<vmem>>, vector<16x16xbf16>
    %cst = arith.constant dense<0.000000e+00> : vector<16x16xf32>
    %3 = tpu.matmul %1, %2, %cst {dimension_numbers = #tpu.dot_dimension_numbers<[1], [0], [0], [1], [0, 0, 1, 1], [], []>} : vector<16x16xbf16>, vector<16x16xbf16>, vector<16x16xf32> -> vector<16x16xf32>
    %c0_3 = arith.constant 0 : index
    %c0_4 = arith.constant 0 : index
    %4 = vector.load %arg6[%c0_3, %c0_4] : memref<16x64xf32, #tpu.memory_space<vmem>>, vector<1x16xf32>
    %5 = vector.broadcast %4 : vector<1x16xf32> to vector<16x16xf32>
    %6 = arith.addf %3, %5 : vector<16x16xf32>
    %cst_5 = arith.constant 0.000000e+00 : f32
    %7 = vector.broadcast %cst_5 : f32 to vector<16x16xf32>
    %8 = arith.maximumf %6, %7 : vector<16x16xf32>
    %9 = arith.truncf %8 : vector<16x16xf32> to vector<16x16xbf16>
    %c16 = arith.constant 16 : index
    %c0_6 = arith.constant 0 : index
    %10 = vector.load %arg5[%c16, %c0_6] : memref<320x64xbf16, #tpu.memory_space<vmem>>, vector<16x32xbf16>
    %cst_7 = arith.constant dense<0.000000e+00> : vector<16x32xf32>
    %11 = tpu.matmul %9, %10, %cst_7 {dimension_numbers = #tpu.dot_dimension_numbers<[1], [0], [0], [1], [0, 0, 1, 1], [], []>} : vector<16x16xbf16>, vector<16x32xbf16>, vector<16x32xf32> -> vector<16x32xf32>
    %c1 = arith.constant 1 : index
    %c0_8 = arith.constant 0 : index
    %12 = vector.load %arg6[%c1, %c0_8] : memref<16x64xf32, #tpu.memory_space<vmem>>, vector<1x32xf32>
    %13 = vector.broadcast %12 : vector<1x32xf32> to vector<16x32xf32>
    %14 = arith.addf %11, %13 : vector<16x32xf32>
    %cst_9 = arith.constant 0.000000e+00 : f32
    %15 = vector.broadcast %cst_9 : f32 to vector<16x32xf32>
    %16 = arith.maximumf %14, %15 : vector<16x32xf32>
    %17 = arith.truncf %16 : vector<16x32xf32> to vector<16x32xbf16>
    %c32 = arith.constant 32 : index
    %c0_10 = arith.constant 0 : index
    %18 = vector.load %arg5[%c32, %c0_10] : memref<320x64xbf16, #tpu.memory_space<vmem>>, vector<32x32xbf16>
    %cst_11 = arith.constant dense<0.000000e+00> : vector<16x32xf32>
    %19 = tpu.matmul %17, %18, %cst_11 {dimension_numbers = #tpu.dot_dimension_numbers<[1], [0], [0], [1], [0, 0, 1, 1], [], []>} : vector<16x32xbf16>, vector<32x32xbf16>, vector<16x32xf32> -> vector<16x32xf32>
    %c2 = arith.constant 2 : index
    %c0_12 = arith.constant 0 : index
    %20 = vector.load %arg6[%c2, %c0_12] : memref<16x64xf32, #tpu.memory_space<vmem>>, vector<1x32xf32>
    %21 = vector.broadcast %20 : vector<1x32xf32> to vector<16x32xf32>
    %22 = arith.addf %19, %21 : vector<16x32xf32>
    %c0_13 = arith.constant 0 : index
    %c0_14 = arith.constant 0 : index
    %23 = vector.load %arg2[%c0_13, %c0_14] : memref<128x16xf32, #tpu.memory_space<vmem>>, vector<128x16xf32>
    %24 = arith.truncf %23 : vector<128x16xf32> to vector<128x16xbf16>
    %c64 = arith.constant 64 : index
    %c0_15 = arith.constant 0 : index
    %25 = vector.load %arg5[%c64, %c0_15] : memref<320x64xbf16, #tpu.memory_space<vmem>>, vector<16x16xbf16>
    %cst_16 = arith.constant dense<0.000000e+00> : vector<128x16xf32>
    %26 = tpu.matmul %24, %25, %cst_16 {dimension_numbers = #tpu.dot_dimension_numbers<[1], [0], [0], [1], [0, 0, 1, 1], [], []>} : vector<128x16xbf16>, vector<16x16xbf16>, vector<128x16xf32> -> vector<128x16xf32>
    %c3 = arith.constant 3 : index
    %c0_17 = arith.constant 0 : index
    %27 = vector.load %arg6[%c3, %c0_17] : memref<16x64xf32, #tpu.memory_space<vmem>>, vector<1x16xf32>
    %28 = vector.broadcast %27 : vector<1x16xf32> to vector<128x16xf32>
    %29 = arith.addf %26, %28 : vector<128x16xf32>
    %cst_18 = arith.constant 0.000000e+00 : f32
    %30 = vector.broadcast %cst_18 : f32 to vector<128x16xf32>
    %31 = arith.maximumf %29, %30 : vector<128x16xf32>
    %32 = arith.truncf %31 : vector<128x16xf32> to vector<128x16xbf16>
    %c80 = arith.constant 80 : index
    %c0_19 = arith.constant 0 : index
    %33 = vector.load %arg5[%c80, %c0_19] : memref<320x64xbf16, #tpu.memory_space<vmem>>, vector<16x32xbf16>
    %cst_20 = arith.constant dense<0.000000e+00> : vector<128x32xf32>
    %34 = tpu.matmul %32, %33, %cst_20 {dimension_numbers = #tpu.dot_dimension_numbers<[1], [0], [0], [1], [0, 0, 1, 1], [], []>} : vector<128x16xbf16>, vector<16x32xbf16>, vector<128x32xf32> -> vector<128x32xf32>
    %c4 = arith.constant 4 : index
    %c0_21 = arith.constant 0 : index
    %35 = vector.load %arg6[%c4, %c0_21] : memref<16x64xf32, #tpu.memory_space<vmem>>, vector<1x32xf32>
    %36 = vector.broadcast %35 : vector<1x32xf32> to vector<128x32xf32>
    %37 = arith.addf %34, %36 : vector<128x32xf32>
    %cst_22 = arith.constant 0.000000e+00 : f32
    %38 = vector.broadcast %cst_22 : f32 to vector<128x32xf32>
    %39 = arith.maximumf %37, %38 : vector<128x32xf32>
    %40 = arith.truncf %39 : vector<128x32xf32> to vector<128x32xbf16>
    %c96 = arith.constant 96 : index
    %c0_23 = arith.constant 0 : index
    %41 = vector.load %arg5[%c96, %c0_23] : memref<320x64xbf16, #tpu.memory_space<vmem>>, vector<32x32xbf16>
    %cst_24 = arith.constant dense<0.000000e+00> : vector<128x32xf32>
    %42 = tpu.matmul %40, %41, %cst_24 {dimension_numbers = #tpu.dot_dimension_numbers<[1], [0], [0], [1], [0, 0, 1, 1], [], []>} : vector<128x32xbf16>, vector<32x32xbf16>, vector<128x32xf32> -> vector<128x32xf32>
    %c5 = arith.constant 5 : index
    %c0_25 = arith.constant 0 : index
    %43 = vector.load %arg6[%c5, %c0_25] : memref<16x64xf32, #tpu.memory_space<vmem>>, vector<1x32xf32>
    %44 = vector.broadcast %43 : vector<1x32xf32> to vector<128x32xf32>
    %45 = arith.addf %42, %44 : vector<128x32xf32>
    %c12 = arith.constant 12 : index
    %c0_26 = arith.constant 0 : index
    %46 = vector.load %arg6[%c12, %c0_26] : memref<16x64xf32, #tpu.memory_space<vmem>>, vector<1x32xf32>
    %47 = tpu.iota {dimensions = array<i32: 1>} : vector<16x8x1xi32>
    %c0_27 = arith.constant 0 : index
    %c0_28 = arith.constant 0 : index
    %48 = vector.load %arg3[%c0_27, %c0_28] : memref<128x32xf32, #tpu.memory_space<vmem>>, vector<128x32xf32>
    %49 = vector.shape_cast %48 : vector<128x32xf32> to vector<16x8x32xf32>
    %c0_i32 = arith.constant 0 : i32
    %50 = vector.broadcast %c0_i32 : i32 to vector<16x8x1xi32>
    %51 = arith.cmpi sgt, %47, %50 : vector<16x8x1xi32>
    %52 = vector.shape_cast %45 : vector<128x32xf32> to vector<16x8x32xf32>
    %53 = vector.shape_cast %46 : vector<1x32xf32> to vector<1x1x32xf32>
    %54 = vector.shape_cast %51 : vector<16x8x1xi1> to vector<16x8x1xi1>
    %55 = vector.broadcast %54 : vector<16x8x1xi1> to vector<16x8x32xi1>
    %56 = vector.shape_cast %53 : vector<1x1x32xf32> to vector<1x1x32xf32>
    %57 = vector.broadcast %56 : vector<1x1x32xf32> to vector<16x8x32xf32>
    %58 = arith.select %55, %52, %57 : vector<16x8x32xi1>, vector<16x8x32xf32>
    %59 = arith.addf %49, %58 : vector<16x8x32xf32>
    %60 = vector.shape_cast %59 : vector<16x8x32xf32> to vector<128x32xf32>
    %61 = arith.truncf %60 : vector<128x32xf32> to vector<128x32xbf16>
    %c160 = arith.constant 160 : index
    %c0_29 = arith.constant 0 : index
    %62 = vector.load %arg5[%c160, %c0_29] : memref<320x64xbf16, #tpu.memory_space<vmem>>, vector<32x64xbf16>
    %cst_30 = arith.constant dense<0.000000e+00> : vector<128x64xf32>
    %63 = tpu.matmul %61, %62, %cst_30 {dimension_numbers = #tpu.dot_dimension_numbers<[1], [0], [0], [1], [0, 0, 1, 1], [], []>} : vector<128x32xbf16>, vector<32x64xbf16>, vector<128x64xf32> -> vector<128x64xf32>
    %64 = vector.extract_strided_slice %63 {offsets = [0, 0], sizes = [128, 32], strides = [1, 1]} : vector<128x64xf32> to vector<128x32xf32>
    %65 = vector.extract_strided_slice %63 {offsets = [0, 32], sizes = [128, 32], strides = [1, 1]} : vector<128x64xf32> to vector<128x32xf32>
    %66 = vector.shape_cast %46 : vector<1x32xf32> to vector<1x32xf32>
    %67 = vector.broadcast %66 : vector<1x32xf32> to vector<16x32xf32>
    %68 = arith.truncf %67 : vector<16x32xf32> to vector<16x32xbf16>
    %c128 = arith.constant 128 : index
    %c0_31 = arith.constant 0 : index
    %69 = vector.load %arg5[%c128, %c0_31] : memref<320x64xbf16, #tpu.memory_space<vmem>>, vector<32x32xbf16>
    %cst_32 = arith.constant dense<0.000000e+00> : vector<16x32xf32>
    %70 = tpu.matmul %68, %69, %cst_32 {dimension_numbers = #tpu.dot_dimension_numbers<[1], [0], [0], [1], [0, 0, 1, 1], [], []>} : vector<16x32xbf16>, vector<32x32xbf16>, vector<16x32xf32> -> vector<16x32xf32>
    %71 = vector.shape_cast %70 : vector<16x32xf32> to vector<16x1x32xf32>
    %72 = vector.shape_cast %71 : vector<16x1x32xf32> to vector<16x1x32xf32>
    %73 = vector.broadcast %72 : vector<16x1x32xf32> to vector<16x8x32xf32>
    %74 = vector.shape_cast %73 : vector<16x8x32xf32> to vector<128x32xf32>
    %75 = tpu.iota {dimensions = array<i32: 0>} : vector<32x4xi32>
    %76 = tpu.iota {dimensions = array<i32: 1>} : vector<32x4xi32>
    %c8_i32 = arith.constant 8 : i32
    %77 = vector.broadcast %c8_i32 : i32 to vector<32x4xi32>
    %78 = arith.muli %76, %77 : vector<32x4xi32>
    %79 = arith.cmpi sge, %75, %78 : vector<32x4xi32>
    %c1_i32 = arith.constant 1 : i32
    %80 = vector.broadcast %c1_i32 : i32 to vector<32x4xi32>
    %81 = arith.addi %76, %80 : vector<32x4xi32>
    %c8_i32_33 = arith.constant 8 : i32
    %82 = vector.broadcast %c8_i32_33 : i32 to vector<32x4xi32>
    %83 = arith.muli %81, %82 : vector<32x4xi32>
    %84 = arith.cmpi slt, %75, %83 : vector<32x4xi32>
    %85 = arith.andi %79, %84 : vector<32x4xi1>
    %86 = arith.extui %85 : vector<32x4xi1> to vector<32x4xi32>
    %87 = arith.sitofp %86 : vector<32x4xi32> to vector<32x4xf32>
    %88 = arith.mulf %74, %64 : vector<128x32xf32>
    %cst_34 = arith.constant dense<0.000000e+00> : vector<128x4xf32>
    %89 = tpu.matmul %88, %87, %cst_34 {dimension_numbers = #tpu.dot_dimension_numbers<[1], [0], [0], [1], [0, 0, 1, 1], [], []>} : vector<128x32xf32>, vector<32x4xf32>, vector<128x4xf32> -> vector<128x4xf32>
    %90 = vector.shape_cast %89 : vector<128x4xf32> to vector<16x8x4xf32>
    %c0_35 = arith.constant 0 : index
    %c0_36 = arith.constant 0 : index
    %c0_37 = arith.constant 0 : index
    %91 = vector.load %arg4[%c0_35, %c0_36, %c0_37] : memref<16x8x1xf32, #tpu.memory_space<vmem>>, vector<16x8x1xf32>
    %92 = vector.broadcast %91 : vector<16x8x1xf32> to vector<16x8x4xf32>
    %93 = arith.addf %90, %92 : vector<16x8x4xf32>
    %cst_38 = arith.constant dense<0xFF800000> : vector<16x4xf32>
    %94 = vector.multi_reduction <maximumf>, %93, %cst_38 [1] : vector<16x8x4xf32> to vector<16x4xf32>
    %95 = vector.shape_cast %94 : vector<16x4xf32> to vector<16x1x4xf32>
    %96 = vector.broadcast %95 : vector<16x1x4xf32> to vector<16x8x4xf32>
    %97 = arith.subf %93, %96 : vector<16x8x4xf32>
    %98 = math.exp %97 : vector<16x8x4xf32>
    %cst_39 = arith.constant dense<0.000000e+00> : vector<16x4xf32>
    %99 = vector.multi_reduction <add>, %98, %cst_39 [1] : vector<16x8x4xf32> to vector<16x4xf32>
    %100 = vector.shape_cast %99 : vector<16x4xf32> to vector<16x1x4xf32>
    %101 = vector.broadcast %100 : vector<16x1x4xf32> to vector<16x8x4xf32>
    %102 = arith.divf %98, %101 : vector<16x8x4xf32>
    %103 = tpu.iota {dimensions = array<i32: 0>} : vector<4x32xi32>
    %104 = tpu.iota {dimensions = array<i32: 1>} : vector<4x32xi32>
    %c8_i32_40 = arith.constant 8 : i32
    %105 = vector.broadcast %c8_i32_40 : i32 to vector<4x32xi32>
    %106 = arith.muli %103, %105 : vector<4x32xi32>
    %107 = arith.cmpi sge, %104, %106 : vector<4x32xi32>
    %c1_i32_41 = arith.constant 1 : i32
    %108 = vector.broadcast %c1_i32_41 : i32 to vector<4x32xi32>
    %109 = arith.addi %103, %108 : vector<4x32xi32>
    %c8_i32_42 = arith.constant 8 : i32
    %110 = vector.broadcast %c8_i32_42 : i32 to vector<4x32xi32>
    %111 = arith.muli %109, %110 : vector<4x32xi32>
    %112 = arith.cmpi slt, %104, %111 : vector<4x32xi32>
    %113 = arith.andi %107, %112 : vector<4x32xi1>
    %114 = arith.extui %113 : vector<4x32xi1> to vector<4x32xi32>
    %115 = arith.sitofp %114 : vector<4x32xi32> to vector<4x32xf32>
    %116 = vector.shape_cast %102 : vector<16x8x4xf32> to vector<128x4xf32>
    %cst_43 = arith.constant dense<0.000000e+00> : vector<128x32xf32>
    %117 = tpu.matmul %116, %115, %cst_43 {dimension_numbers = #tpu.dot_dimension_numbers<[1], [0], [0], [1], [0, 0, 1, 1], [], []>} : vector<128x4xf32>, vector<4x32xf32>, vector<128x32xf32> -> vector<128x32xf32>
    %118 = arith.mulf %117, %65 : vector<128x32xf32>
    %119 = vector.shape_cast %118 : vector<128x32xf32> to vector<16x8x32xf32>
    %cst_44 = arith.constant dense<0.000000e+00> : vector<16x32xf32>
    %120 = vector.multi_reduction <add>, %119, %cst_44 [1] : vector<16x8x32xf32> to vector<16x32xf32>
    %121 = arith.truncf %120 : vector<16x32xf32> to vector<16x32xbf16>
    %c192 = arith.constant 192 : index
    %c0_45 = arith.constant 0 : index
    %122 = vector.load %arg5[%c192, %c0_45] : memref<320x64xbf16, #tpu.memory_space<vmem>>, vector<32x32xbf16>
    %cst_46 = arith.constant dense<0.000000e+00> : vector<16x32xf32>
    %123 = tpu.matmul %121, %122, %cst_46 {dimension_numbers = #tpu.dot_dimension_numbers<[1], [0], [0], [1], [0, 0, 1, 1], [], []>} : vector<16x32xbf16>, vector<32x32xbf16>, vector<16x32xf32> -> vector<16x32xf32>
    %124 = arith.addf %67, %123 : vector<16x32xf32>
    %c6 = arith.constant 6 : index
    %c0_47 = arith.constant 0 : index
    %125 = vector.load %arg6[%c6, %c0_47] : memref<16x64xf32, #tpu.memory_space<vmem>>, vector<1x32xf32>
    %c7 = arith.constant 7 : index
    %c0_48 = arith.constant 0 : index
    %126 = vector.load %arg6[%c7, %c0_48] : memref<16x64xf32, #tpu.memory_space<vmem>>, vector<1x32xf32>
    %cst_49 = arith.constant dense<0.000000e+00> : vector<16xf32>
    %127 = vector.multi_reduction <add>, %124, %cst_49 [1] : vector<16x32xf32> to vector<16xf32>
    %128 = vector.shape_cast %127 : vector<16xf32> to vector<16x1xf32>
    %cst_50 = arith.constant 3.200000e+01 : f32
    %129 = vector.broadcast %cst_50 : f32 to vector<16x1xf32>
    %130 = arith.divf %128, %129 : vector<16x1xf32>
    %131 = vector.broadcast %130 : vector<16x1xf32> to vector<16x32xf32>
    %132 = arith.subf %124, %131 : vector<16x32xf32>
    %133 = arith.mulf %132, %132 : vector<16x32xf32>
    %cst_51 = arith.constant dense<0.000000e+00> : vector<16xf32>
    %134 = vector.multi_reduction <add>, %133, %cst_51 [1] : vector<16x32xf32> to vector<16xf32>
    %135 = vector.shape_cast %134 : vector<16xf32> to vector<16x1xf32>
    %cst_52 = arith.constant 3.200000e+01 : f32
    %136 = vector.broadcast %cst_52 : f32 to vector<16x1xf32>
    %137 = arith.divf %135, %136 : vector<16x1xf32>
    %138 = vector.broadcast %130 : vector<16x1xf32> to vector<16x32xf32>
    %139 = arith.subf %124, %138 : vector<16x32xf32>
    %cst_53 = arith.constant 9.99999997E-7 : f32
    %140 = vector.broadcast %cst_53 : f32 to vector<16x1xf32>
    %141 = arith.addf %137, %140 : vector<16x1xf32>
    %142 = math.rsqrt %141 : vector<16x1xf32>
    %143 = vector.broadcast %142 : vector<16x1xf32> to vector<16x32xf32>
    %144 = arith.mulf %139, %143 : vector<16x32xf32>
    %145 = vector.broadcast %125 : vector<1x32xf32> to vector<16x32xf32>
    %146 = arith.mulf %144, %145 : vector<16x32xf32>
    %147 = vector.broadcast %126 : vector<1x32xf32> to vector<16x32xf32>
    %148 = arith.addf %146, %147 : vector<16x32xf32>
    %149 = arith.truncf %148 : vector<16x32xf32> to vector<16x32xbf16>
    %c224 = arith.constant 224 : index
    %c0_54 = arith.constant 0 : index
    %150 = vector.load %arg5[%c224, %c0_54] : memref<320x64xbf16, #tpu.memory_space<vmem>>, vector<32x64xbf16>
    %cst_55 = arith.constant dense<0.000000e+00> : vector<16x64xf32>
    %151 = tpu.matmul %149, %150, %cst_55 {dimension_numbers = #tpu.dot_dimension_numbers<[1], [0], [0], [1], [0, 0, 1, 1], [], []>} : vector<16x32xbf16>, vector<32x64xbf16>, vector<16x64xf32> -> vector<16x64xf32>
    %c8 = arith.constant 8 : index
    %c0_56 = arith.constant 0 : index
    %152 = vector.load %arg6[%c8, %c0_56] : memref<16x64xf32, #tpu.memory_space<vmem>>, vector<1x64xf32>
    %153 = vector.broadcast %152 : vector<1x64xf32> to vector<16x64xf32>
    %154 = arith.addf %151, %153 : vector<16x64xf32>
    %cst_57 = arith.constant 0.000000e+00 : f32
    %155 = vector.broadcast %cst_57 : f32 to vector<16x64xf32>
    %156 = arith.maximumf %154, %155 : vector<16x64xf32>
    %157 = arith.truncf %156 : vector<16x64xf32> to vector<16x64xbf16>
    %c256 = arith.constant 256 : index
    %c0_58 = arith.constant 0 : index
    %158 = vector.load %arg5[%c256, %c0_58] : memref<320x64xbf16, #tpu.memory_space<vmem>>, vector<64x32xbf16>
    %cst_59 = arith.constant dense<0.000000e+00> : vector<16x32xf32>
    %159 = tpu.matmul %157, %158, %cst_59 {dimension_numbers = #tpu.dot_dimension_numbers<[1], [0], [0], [1], [0, 0, 1, 1], [], []>} : vector<16x64xbf16>, vector<64x32xbf16>, vector<16x32xf32> -> vector<16x32xf32>
    %c9 = arith.constant 9 : index
    %c0_60 = arith.constant 0 : index
    %160 = vector.load %arg6[%c9, %c0_60] : memref<16x64xf32, #tpu.memory_space<vmem>>, vector<1x32xf32>
    %161 = vector.broadcast %160 : vector<1x32xf32> to vector<16x32xf32>
    %162 = arith.addf %159, %161 : vector<16x32xf32>
    %163 = arith.addf %162, %148 : vector<16x32xf32>
    %c10 = arith.constant 10 : index
    %c0_61 = arith.constant 0 : index
    %164 = vector.load %arg6[%c10, %c0_61] : memref<16x64xf32, #tpu.memory_space<vmem>>, vector<1x32xf32>
    %c11 = arith.constant 11 : index
    %c0_62 = arith.constant 0 : index
    %165 = vector.load %arg6[%c11, %c0_62] : memref<16x64xf32, #tpu.memory_space<vmem>>, vector<1x32xf32>
    %cst_63 = arith.constant dense<0.000000e+00> : vector<16xf32>
    %166 = vector.multi_reduction <add>, %163, %cst_63 [1] : vector<16x32xf32> to vector<16xf32>
    %167 = vector.shape_cast %166 : vector<16xf32> to vector<16x1xf32>
    %cst_64 = arith.constant 3.200000e+01 : f32
    %168 = vector.broadcast %cst_64 : f32 to vector<16x1xf32>
    %169 = arith.divf %167, %168 : vector<16x1xf32>
    %170 = vector.broadcast %169 : vector<16x1xf32> to vector<16x32xf32>
    %171 = arith.subf %163, %170 : vector<16x32xf32>
    %172 = arith.mulf %171, %171 : vector<16x32xf32>
    %cst_65 = arith.constant dense<0.000000e+00> : vector<16xf32>
    %173 = vector.multi_reduction <add>, %172, %cst_65 [1] : vector<16x32xf32> to vector<16xf32>
    %174 = vector.shape_cast %173 : vector<16xf32> to vector<16x1xf32>
    %cst_66 = arith.constant 3.200000e+01 : f32
    %175 = vector.broadcast %cst_66 : f32 to vector<16x1xf32>
    %176 = arith.divf %174, %175 : vector<16x1xf32>
    %177 = vector.broadcast %169 : vector<16x1xf32> to vector<16x32xf32>
    %178 = arith.subf %163, %177 : vector<16x32xf32>
    %cst_67 = arith.constant 9.99999997E-7 : f32
    %179 = vector.broadcast %cst_67 : f32 to vector<16x1xf32>
    %180 = arith.addf %176, %179 : vector<16x1xf32>
    %181 = math.rsqrt %180 : vector<16x1xf32>
    %182 = vector.broadcast %181 : vector<16x1xf32> to vector<16x32xf32>
    %183 = arith.mulf %178, %182 : vector<16x32xf32>
    %184 = vector.broadcast %164 : vector<1x32xf32> to vector<16x32xf32>
    %185 = arith.mulf %183, %184 : vector<16x32xf32>
    %186 = vector.broadcast %165 : vector<1x32xf32> to vector<16x32xf32>
    %187 = arith.addf %185, %186 : vector<16x32xf32>
    %188 = arith.addf %22, %187 : vector<16x32xf32>
    %c0_68 = arith.constant 0 : index
    %c0_69 = arith.constant 0 : index
    %189 = vector.load %arg7[%c0_68, %c0_69] : memref<16x32xf32, #tpu.memory_space<vmem>>, vector<16x32xf32>
    tpu.vector_store %arg7[%c0_68, %c0_69], %188 {strides = array<i32>} : memref<16x32xf32, #tpu.memory_space<vmem>>, vector<16x32xf32>,
    return
  }
  func.func @transform_0(%arg0: i32) -> (i32, i32) {
    %c0_i32 = arith.constant 0 : i32
    %c0_i32_0 = arith.constant 0 : i32
    %c0_i32_1 = arith.constant 0 : i32
    return %c0_i32, %c0_i32_0 : i32, i32
  }
  func.func @transform_1(%arg0: i32) -> (i32, i32) {
    %c0_i32 = arith.constant 0 : i32
    %c0_i32_0 = arith.constant 0 : i32
    %c0_i32_1 = arith.constant 0 : i32
    return %c0_i32, %c0_i32_0 : i32, i32
  }
  func.func @transform_2(%arg0: i32) -> (i32, i32) {
    %c0_i32 = arith.constant 0 : i32
    %c0_i32_0 = arith.constant 0 : i32
    %c0_i32_1 = arith.constant 0 : i32
    return %c0_i32, %c0_i32_0 : i32, i32
  }
  func.func @transform_3(%arg0: i32) -> (i32, i32, i32) {
    %c0_i32 = arith.constant 0 : i32
    %c0_i32_0 = arith.constant 0 : i32
    %c0_i32_1 = arith.constant 0 : i32
    %c0_i32_2 = arith.constant 0 : i32
    return %c0_i32, %c0_i32_0, %c0_i32_1 : i32, i32, i32
  }
  func.func @transform_4(%arg0: i32) -> (i32, i32) {
    %c0_i32 = arith.constant 0 : i32
    %c0_i32_0 = arith.constant 0 : i32
    %c0_i32_1 = arith.constant 0 : i32
    return %c0_i32, %c0_i32_0 : i32, i32
  }
  func.func @transform_5(%arg0: i32) -> (i32, i32) {
    %c0_i32 = arith.constant 0 : i32
    %c0_i32_0 = arith.constant 0 : i32
    %c0_i32_1 = arith.constant 0 : i32
    return %c0_i32, %c0_i32_0 : i32, i32
  }
  func.func @transform_6(%arg0: i32) -> (i32, i32) {
    %c0_i32 = arith.constant 0 : i32
    %c0_i32_0 = arith.constant 0 : i32
    %c0_i32_1 = arith.constant 0 : i32
    return %c0_i32, %c0_i32_0 : i32, i32
  }
}

</mosaic_0001>

<llo_original>
// kernel: tpu_custom_call.1
$region0: #{tpu_custom_call.1}
  #allocation0 [shape = 'u32[]', space=smem, size = 0x4, offset = 0x4, fixed_abs, tag = 'smem constant byte address 0x4 - core index']
  #allocation1 [shape = 'u32[144,128]{1,0:T(1,128)}', space=vmem, size = 0x12000, scoped, tag = 'internal scratch']
  %s0 = inlined_call_operand.vmem [shape: f32[16,16], index: 0, kind: input, shape index: {}]
  %s1 = inlined_call_operand.vmem [shape: f32[128,16], index: 1, kind: input, shape index: {}]
  %s2 = inlined_call_operand.vmem [shape: f32[128,32], index: 2, kind: input, shape index: {}]
  %s3 = inlined_call_operand.vmem [shape: f32[16,8,1], index: 3, kind: input, shape index: {}]
  %s4 = inlined_call_operand.vmem [shape: bf16[320,64], index: 4, kind: input, shape index: {}]
  %s5 = inlined_call_operand.vmem [shape: f32[16,64], index: 5, kind: input, shape index: {}]
  %s6 = inlined_call_operand.hbm [shape: f32[16,32], index: 6, kind: output, shape index: {}]
  %s7 = sld [smem:[#allocation0]]
  $region34: #{tpu_custom_call.1} parent=0
    _
  %s9 = ssub.s32 1, %s7
  %s10 = scalar_select 0, %s9, %s7
  $region1: #{tpu_custom_call.1} parent=0
    #allocation2 [shape = 'u8[8192]{0}', space=vmem, size = 0x2000, scoped, tag = 'output window, operand 0, single buffered']
    #allocation3 [shape = 's32[1]{0}', space=sflag, size = 0x4, scoped, tag = 'scoped memory for tpu_custom_call.1']
    %11 = vsyncpa [#allocation3], 0
    // Predicated region
    $region2: #{tpu_custom_call.1} parent=1 // pred_check
      _
    $region3: #{tpu_custom_call.1} parent=1 // pred_check_branch
      %13 = sbr.rel (0) target = $region5
    $region4: #{tpu_custom_call.1} parent=1 // pred_region
      _
    $region5: #{tpu_custom_call.1} parent=1 // pred_fallthru
      _
    // Predicated region
    $region6: #{tpu_custom_call.1} parent=1 // pred_check
      _
    $region7: #{tpu_custom_call.1} parent=1 // pred_check_branch
      %15 = sbr.rel (0) target = $region9
    $region8: #{tpu_custom_call.1} parent=1 // pred_region
      _
    $region9: #{tpu_custom_call.1} parent=1 // pred_fallthru
      _
    // Predicated region
    $region10: #{tpu_custom_call.1} parent=1 // pred_check
      _
    $region11: #{tpu_custom_call.1} parent=1 // pred_check_branch
      %17 = sbr.rel (0) target = $region13
    $region12: #{tpu_custom_call.1} parent=1 // pred_region
      _
    $region13: #{tpu_custom_call.1} parent=1 // pred_fallthru
      _
    // Predicated region
    $region14: #{tpu_custom_call.1} parent=1 // pred_check
      _
    $region15: #{tpu_custom_call.1} parent=1 // pred_check_branch
      %19 = sbr.rel (0) target = $region17
    $region16: #{tpu_custom_call.1} parent=1 // pred_region
      _
    $region17: #{tpu_custom_call.1} parent=1 // pred_fallthru
      _
    // Predicated region
    $region18: #{tpu_custom_call.1} parent=1 // pred_check
      _
    $region19: #{tpu_custom_call.1} parent=1 // pred_check_branch
      %21 = sbr.rel (0) target = $region21
    $region20: #{tpu_custom_call.1} parent=1 // pred_region
      _
    $region21: #{tpu_custom_call.1} parent=1 // pred_fallthru
      _
    // Predicated region
    $region22: #{tpu_custom_call.1} parent=1 // pred_check
      _
    $region23: #{tpu_custom_call.1} parent=1 // pred_check_branch
      %23 = sbr.rel (0) target = $region25
    $region24: #{tpu_custom_call.1} parent=1 // pred_region
      _
    $region25: #{tpu_custom_call.1} parent=1 // pred_fallthru
      _
    %v25 = vld [vmem:[%s0] sm:$0xff]
    %v26 = vld [vmem:[%s0 + $0x8] sm:$0xff]
    %v27 = vpack.c.bf16 %v26, %v25
    %v28 = vld [vmem:[%s4] sm:$0xf]
    %v29 = vld [vmem:[%s4 + $0x4] sm:$0xf]
    %v30 = vld [vmem:[%s5] sm:$0x1]
    %v31 = vlaneseq
    %v32 = vshrl.u32 %v31, 7
    %v33 = vsub.s32 0, %v32
    %v34 = vrot.slane %v30, %v33
    %v37 = vunpack.c.l.b16 %v28
    %v38 = vunpack.c.l.b16 %v29
    %v39 = vpack.c.b16 %v38, %v37
    %vm41 = vcmask 130048
    %v43 = vsel %vm41, %v27, 0
    %45 = vmatprep.subr.bf16.mxu0 0
    %46 = vmatpush1.bf16.msra.mxu0 0
    %47 = vmatprep.subr.bf16.mxu0 0
    %48 = vmatpush1.bf16.msra.mxu0 0
    %49 = vmatprep.subr.bf16.mxu0 0
    %50 = vmatpush1.bf16.msra.mxu0 0
    %51 = vmatprep.subr.bf16.mxu0 0
    %52 = vmatpush1.bf16.msra.mxu0 0
    %53 = vmatprep.subr.bf16.mxu0 0
    %54 = vmatpush1.bf16.msra.mxu0 0
    %55 = vmatprep.subr.bf16.mxu0 0
    %56 = vmatpush1.bf16.msra.mxu0 0
    %57 = vmatprep.subr.bf16.mxu0 0
    %58 = vmatpush1.bf16.msra.mxu0 0
    %59 = vmatprep.subr.bf16.mxu0 0
    %60 = vmatpush1.bf16.msra.mxu0 %v39
    %61 = vmatprep.subr.bf16.mxu0 0
    %62 = vmatpush2.bf16.msra.mxu0 0
    %63 = vmatprep.subr.bf16.mxu0 0
    %64 = vmatpush2.bf16.msra.mxu0 0
    %65 = vmatprep.subr.bf16.mxu0 0
    %66 = vmatpush2.bf16.msra.mxu0 0
    %67 = vmatprep.subr.bf16.mxu0 0
    %68 = vmatpush2.bf16.msra.mxu0 0
    %69 = vmatprep.subr.bf16.mxu0 0
    %70 = vmatpush2.bf16.msra.mxu0 0
    %71 = vmatprep.subr.bf16.mxu0 0
    %72 = vmatpush2.bf16.msra.mxu0 0
    %73 = vmatprep.subr.bf16.mxu0 0
    %74 = vmatpush2.bf16.msra.mxu0 0
    %75 = vmatprep.subr.bf16.mxu0 0
    %76 = vmatpush2.bf16.msra.mxu0 0
    %77 = vmatprep.mubr.bf16.mxu0 0
    %78 = vmatmul.mubr.bf16.gmra.mxu0 %v43
    %v79 = vpop.f32.mrf.mxu0
    %v80 = vadd.f32 %v34, %v79
    %v81 = vpop.f32.mrf.mxu0
    %v82 = vpop.f32.mrf.mxu0
    %v83 = vadd.f32 %v34, %v82
    %v84 = vpop.f32.mrf.mxu0
    %85 = vdwg.mxu0
    %v86 = vmax.f32 %v80, 0.0
    %v87 = vmax.f32 %v83, 0.0
    %v88 = vpack.c.bf16 %v87, %v86
    %v89 = vld [vmem:[%s4 + $0x8] sm:$0xf]
    %v90 = vld [vmem:[%s4 + $0xc] sm:$0xf]
    %v91 = vld [vmem:[%s5 + $0x1] sm:$0x1]
    %v92 = vlaneseq
    %v93 = vshrl.u32 %v92, 7
    %v94 = vsub.s32 0, %v93
    %v95 = vrot.slane %v91, %v94
    %v98 = vunpack.c.l.b16 %v89
    %v99 = vunpack.c.l.b16 %v90
    %v100 = vpack.c.b16 %v99, %v98
    %v103 = vsel %vm41, %v88, 0
    %105 = vmatprep.subr.bf16.mxu0 0
    %106 = vmatpush1.bf16.msra.mxu0 0
    %107 = vmatprep.subr.bf16.mxu0 0
    %108 = vmatpush1.bf16.msra.mxu0 0
    %109 = vmatprep.subr.bf16.mxu0 0
    %110 = vmatpush1.bf16.msra.mxu0 0
    %111 = vmatprep.subr.bf16.mxu0 0
    %112 = vmatpush1.bf16.msra.mxu0 0
    %113 = vmatprep.subr.bf16.mxu0 0
    %114 = vmatpush1.bf16.msra.mxu0 0
    %115 = vmatprep.subr.bf16.mxu0 0
    %116 = vmatpush1.bf16.msra.mxu0 0
    %117 = vmatprep.subr.bf16.mxu0 0
    %118 = vmatpush1.bf16.msra.mxu0 0
    %119 = vmatprep.subr.bf16.mxu0 0
    %120 = vmatpush1.bf16.msra.mxu0 %v100
    %121 = vmatprep.subr.bf16.mxu0 0
    %122 = vmatpush2.bf16.msra.mxu0 0
    %123 = vmatprep.subr.bf16.mxu0 0
    %124 = vmatpush2.bf16.msra.mxu0 0
    %125 = vmatprep.subr.bf16.mxu0 0
    %126 = vmatpush2.bf16.msra.mxu0 0
    %127 = vmatprep.subr.bf16.mxu0 0
    %128 = vmatpush2.bf16.msra.mxu0 0
    %129 = vmatprep.subr.bf16.mxu0 0
    %130 = vmatpush2.bf16.msra.mxu0 0
    %131 = vmatprep.subr.bf16.mxu0 0
    %132 = vmatpush2.bf16.msra.mxu0 0
    %133 = vmatprep.subr.bf16.mxu0 0
    %134 = vmatpush2.bf16.msra.mxu0 0
    %135 = vmatprep.subr.bf16.mxu0 0
    %136 = vmatpush2.bf16.msra.mxu0 0
    %137 = vmatprep.mubr.bf16.mxu0 0
    %138 = vmatmul.mubr.bf16.gmra.mxu0 %v103
    %v139 = vpop.f32.mrf.mxu0
    %v140 = vadd.f32 %v95, %v139
    %v141 = vpop.f32.mrf.mxu0
    %v142 = vpop.f32.mrf.mxu0
    %v143 = vadd.f32 %v95, %v142
    %v144 = vpop.f32.mrf.mxu0
    %145 = vdwg.mxu0
    %v146 = vmax.f32 %v140, 0.0
    %v147 = vmax.f32 %v143, 0.0
    %v148 = vpack.c.bf16 %v147, %v146
    %v149 = vld [vmem:[%s4 + $0x10] sm:$0xf]
    %v150 = vld [vmem:[%s4 + $0x14] sm:$0xf]
    %v151 = vld [vmem:[%s4 + $0x18] sm:$0xf]
    %v152 = vld [vmem:[%s4 + $0x1c] sm:$0xf]
    %v153 = vld [vmem:[%s5 + $0x2] sm:$0x1]
    %v154 = vlaneseq
    %v155 = vshrl.u32 %v154, 7
    %v156 = vsub.s32 0, %v155
    %v157 = vrot.slane %v153, %v156
    %v162 = vunpack.c.l.b16 %v149
    %v163 = vunpack.c.l.b16 %v150
    %v164 = vunpack.c.l.b16 %v151
    %v165 = vunpack.c.l.b16 %v152
    %v166 = vpack.c.b16 %v163, %v162
    %v167 = vpack.c.b16 %v165, %v164
    %vm170 = vcmask 261120
    %v172 = vsel %vm170, %v148, 0
    %174 = vmatprep.subr.bf16.mxu0 0
    %175 = vmatpush1.bf16.msra.mxu0 0
    %176 = vmatprep.subr.bf16.mxu0 0
    %177 = vmatpush1.bf16.msra.mxu0 0
    %178 = vmatprep.subr.bf16.mxu0 0
    %179 = vmatpush1.bf16.msra.mxu0 0
    %180 = vmatprep.subr.bf16.mxu0 0
    %181 = vmatpush1.bf16.msra.mxu0 0
    %182 = vmatprep.subr.bf16.mxu0 0
    %183 = vmatpush1.bf16.msra.mxu0 0
    %184 = vmatprep.subr.bf16.mxu0 0
    %185 = vmatpush1.bf16.msra.mxu0 0
    %186 = vmatprep.subr.bf16.mxu0 0
    %187 = vmatpush1.bf16.msra.mxu0 %v167
    %188 = vmatprep.subr.bf16.mxu0 0
    %189 = vmatpush1.bf16.msra.mxu0 %v166
    %190 = vmatprep.subr.bf16.mxu0 0
    %191 = vmatpush2.bf16.msra.mxu0 0
    %192 = vmatprep.subr.bf16.mxu0 0
    %193 = vmatpush2.bf16.msra.mxu0 0
    %194 = vmatprep.subr.bf16.mxu0 0
    %195 = vmatpush2.bf16.msra.mxu0 0
    %196 = vmatprep.subr.bf16.mxu0 0
    %197 = vmatpush2.bf16.msra.mxu0 0
    %198 = vmatprep.subr.bf16.mxu0 0
    %199 = vmatpush2.bf16.msra.mxu0 0
    %200 = vmatprep.subr.bf16.mxu0 0
    %201 = vmatpush2.bf16.msra.mxu0 0
    %202 = vmatprep.subr.bf16.mxu0 0
    %203 = vmatpush2.bf16.msra.mxu0 0
    %204 = vmatprep.subr.bf16.mxu0 0
    %205 = vmatpush2.bf16.msra.mxu0 0
    %206 = vmatprep.mubr.bf16.mxu0 0
    %207 = vmatmul.mubr.bf16.gmra.mxu0 %v172
    %v208 = vpop.f32.mrf.mxu0
    %v209 = vadd.f32 %v157, %v208
    %v210 = vpop.f32.mrf.mxu0
    %v211 = vpop.f32.mrf.mxu0
    %v212 = vadd.f32 %v157, %v211
    %v213 = vpop.f32.mrf.mxu0
    %214 = vdwg.mxu0
    %v215 = vld [vmem:[%s1] sm:$0xff]
    %v216 = vld [vmem:[%s1 + $0x8] sm:$0xff]
    %v217 = vld [vmem:[%s1 + $0x10] sm:$0xff]
    %v218 = vld [vmem:[%s1 + $0x18] sm:$0xff]
    %v219 = vld [vmem:[%s1 + $0x20] sm:$0xff]
    %v220 = vld [vmem:[%s1 + $0x28] sm:$0xff]
    %v221 = vld [vmem:[%s1 + $0x30] sm:$0xff]
    %v222 = vld [vmem:[%s1 + $0x38] sm:$0xff]
    %v223 = vld [vmem:[%s1 + $0x40] sm:$0xff]
    %v224 = vld [vmem:[%s1 + $0x48] sm:$0xff]
    %v225 = vld [vmem:[%s1 + $0x50] sm:$0xff]
    %v226 = vld [vmem:[%s1 + $0x58] sm:$0xff]
    %v227 = vld [vmem:[%s1 + $0x60] sm:$0xff]
    %v228 = vld [vmem:[%s1 + $0x68] sm:$0xff]
    %v229 = vld [vmem:[%s1 + $0x70] sm:$0xff]
    %v230 = vld [vmem:[%s1 + $0x78] sm:$0xff]
    %v231 = vpack.c.bf16 %v216, %v215
    %v232 = vpack.c.bf16 %v218, %v217
    %v233 = vpack.c.bf16 %v220, %v219
    %v234 = vpack.c.bf16 %v222, %v221
    %v235 = vpack.c.bf16 %v224, %v223
    %v236 = vpack.c.bf16 %v226, %v225
    %v237 = vpack.c.bf16 %v228, %v227
    %v238 = vpack.c.bf16 %v230, %v229
    %v239 = vld [vmem:[%s4 + $0x20] sm:$0xf]
    %v240 = vld [vmem:[%s4 + $0x24] sm:$0xf]
    %v241 = vld [vmem:[%s5 + $0x3] sm:$0x1]
    %v242 = vlaneseq
    %v243 = vshrl.u32 %v242, 7
    %v244 = vsub.s32 0, %v243
    %v245 = vrot.slane %v241, %v244
    %v248 = vunpack.c.l.b16 %v239
    %v249 = vunpack.c.l.b16 %v240
    %v250 = vpack.c.b16 %v249, %v248
    %v253 = vsel %vm41, %v231, 0
    %v256 = vsel %vm41, %v232, 0
    %v259 = vsel %vm41, %v233, 0
    %v262 = vsel %vm41, %v234, 0
    %v265 = vsel %vm41, %v235, 0
    %v268 = vsel %vm41, %v236, 0
    %v271 = vsel %vm41, %v237, 0
    %v274 = vsel %vm41, %v238, 0
    %276 = vmatprep.subr.bf16.mxu0 0
    %277 = vmatpush1.bf16.msra.mxu0 0
    %278 = vmatprep.subr.bf16.mxu0 0
    %279 = vmatpush1.bf16.msra.mxu0 0
    %280 = vmatprep.subr.bf16.mxu0 0
    %281 = vmatpush1.bf16.msra.mxu0 0
    %282 = vmatprep.subr.bf16.mxu0 0
    %283 = vmatpush1.bf16.msra.mxu0 0
    %284 = vmatprep.subr.bf16.mxu0 0
    %285 = vmatpush1.bf16.msra.mxu0 0
    %286 = vmatprep.subr.bf16.mxu0 0
    %287 = vmatpush1.bf16.msra.mxu0 0
    %288 = vmatprep.subr.bf16.mxu0 0
    %289 = vmatpush1.bf16.msra.mxu0 0
    %290 = vmatprep.subr.bf16.mxu0 0
    %291 = vmatpush1.bf16.msra.mxu0 %v250
    %292 = vmatprep.subr.bf16.mxu0 0
    %293 = vmatpush2.bf16.msra.mxu0 0
    %294 = vmatprep.subr.bf16.mxu0 0
    %295 = vmatpush2.bf16.msra.mxu0 0
    %296 = vmatprep.subr.bf16.mxu0 0
    %297 = vmatpush2.bf16.msra.mxu0 0
    %298 = vmatprep.subr.bf16.mxu0 0
    %299 = vmatpush2.bf16.msra.mxu0 0
    %300 = vmatprep.subr.bf16.mxu0 0
    %301 = vmatpush2.bf16.msra.mxu0 0
    %302 = vmatprep.subr.bf16.mxu0 0
    %303 = vmatpush2.bf16.msra.mxu0 0
    %304 = vmatprep.subr.bf16.mxu0 0
    %305 = vmatpush2.bf16.msra.mxu0 0
    %306 = vmatprep.subr.bf16.mxu0 0
    %307 = vmatpush2.bf16.msra.mxu0 0
    %308 = vmatprep.mubr.bf16.mxu0 0
    %309 = vmatmul.mubr.bf16.gmra.mxu0 %v253
    %v310 = vpop.f32.mrf.mxu0
    %v311 = vadd.f32 %v245, %v310
    %v312 = vpop.f32.mrf.mxu0
    %v313 = vpop.f32.mrf.mxu0
    %v314 = vadd.f32 %v245, %v313
    %v315 = vpop.f32.mrf.mxu0
    %316 = vmatprep.mubr.bf16.mxu0 0
    %317 = vmatmul.mubr.bf16.gmra.mxu0 %v256
    %v318 = vpop.f32.mrf.mxu0
    %v319 = vadd.f32 %v245, %v318
    %v320 = vpop.f32.mrf.mxu0
    %v321 = vpop.f32.mrf.mxu0
    %v322 = vadd.f32 %v245, %v321
    %v323 = vpop.f32.mrf.mxu0
    %324 = vmatprep.mubr.bf16.mxu0 0
    %325 = vmatmul.mubr.bf16.gmra.mxu0 %v259
    %v326 = vpop.f32.mrf.mxu0
    %v327 = vadd.f32 %v245, %v326
    %v328 = vpop.f32.mrf.mxu0
    %v329 = vpop.f32.mrf.mxu0
    %v330 = vadd.f32 %v245, %v329
    %v331 = vpop.f32.mrf.mxu0
    %332 = vmatprep.mubr.bf16.mxu0 0
    %333 = vmatmul.mubr.bf16.gmra.mxu0 %v262
    %v334 = vpop.f32.mrf.mxu0
    %v335 = vadd.f32 %v245, %v334
    %v336 = vpop.f32.mrf.mxu0
    %v337 = vpop.f32.mrf.mxu0
    %v338 = vadd.f32 %v245, %v337
    %v339 = vpop.f32.mrf.mxu0
    %340 = vmatprep.mubr.bf16.mxu0 0
    %341 = vmatmul.mubr.bf16.gmra.mxu0 %v265
    %v342 = vpop.f32.mrf.mxu0
    %v343 = vadd.f32 %v245, %v342
    %v344 = vpop.f32.mrf.mxu0
    %v345 = vpop.f32.mrf.mxu0
    %v346 = vadd.f32 %v245, %v345
    %v347 = vpop.f32.mrf.mxu0
    %348 = vmatprep.mubr.bf16.mxu0 0
    %349 = vmatmul.mubr.bf16.gmra.mxu0 %v268
    %v350 = vpop.f32.mrf.mxu0
    %v351 = vadd.f32 %v245, %v350
    %v352 = vpop.f32.mrf.mxu0
    %v353 = vpop.f32.mrf.mxu0
    %v354 = vadd.f32 %v245, %v353
    %v355 = vpop.f32.mrf.mxu0
    %356 = vmatprep.mubr.bf16.mxu0 0
    %357 = vmatmul.mubr.bf16.gmra.mxu0 %v271
    %v358 = vpop.f32.mrf.mxu0
    %v359 = vadd.f32 %v245, %v358
    %v360 = vpop.f32.mrf.mxu0
    %v361 = vpop.f32.mrf.mxu0
    %v362 = vadd.f32 %v245, %v361
    %v363 = vpop.f32.mrf.mxu0
    %364 = vmatprep.mubr.bf16.mxu0 0
    %365 = vmatmul.mubr.bf16.gmra.mxu0 %v274
    %v366 = vpop.f32.mrf.mxu0
    %v367 = vadd.f32 %v245, %v366
    %v368 = vpop.f32.mrf.mxu0
    %v369 = vpop.f32.mrf.mxu0
    %v370 = vadd.f32 %v245, %v369
    %v371 = vpop.f32.mrf.mxu0
    %372 = vdwg.mxu0
    %v373 = vmax.f32 %v311, 0.0
    %v374 = vmax.f32 %v314, 0.0
    %v375 = vmax.f32 %v319, 0.0
    %v376 = vmax.f32 %v322, 0.0
    %v377 = vmax.f32 %v327, 0.0
    %v378 = vmax.f32 %v330, 0.0
    %v379 = vmax.f32 %v335, 0.0
    %v380 = vmax.f32 %v338, 0.0
    %v381 = vmax.f32 %v343, 0.0
    %v382 = vmax.f32 %v346, 0.0
    %v383 = vmax.f32 %v351, 0.0
    %v384 = vmax.f32 %v354, 0.0
    %v385 = vmax.f32 %v359, 0.0
    %v386 = vmax.f32 %v362, 0.0
    %v387 = vmax.f32 %v367, 0.0
    %v388 = vmax.f32 %v370, 0.0
    %v389 = vpack.c.bf16 %v374, %v373
    %v390 = vpack.c.bf16 %v376, %v375
    %v391 = vpack.c.bf16 %v378, %v377
    %v392 = vpack.c.bf16 %v380, %v379
    %v393 = vpack.c.bf16 %v382, %v381
    %v394 = vpack.c.bf16 %v384, %v383
    %v395 = vpack.c.bf16 %v386, %v385
    %v396 = vpack.c.bf16 %v388, %v387
    %v397 = vld [vmem:[%s4 + $0x28] sm:$0xf]
    %v398 = vld [vmem:[%s4 + $0x2c] sm:$0xf]
    %v399 = vld [vmem:[%s5 + $0x4] sm:$0x1]
    %v400 = vlaneseq
    %v401 = vshrl.u32 %v400, 7
    %v402 = vsub.s32 0, %v401
    %v403 = vrot.slane %v399, %v402
    %v406 = vunpack.c.l.b16 %v397
    %v407 = vunpack.c.l.b16 %v398
    %v408 = vpack.c.b16 %v407, %v406
    %v411 = vsel %vm41, %v389, 0
    %v414 = vsel %vm41, %v390, 0
    %v417 = vsel %vm41, %v391, 0
    %v420 = vsel %vm41, %v392, 0
    %v423 = vsel %vm41, %v393, 0
    %v426 = vsel %vm41, %v394, 0
    %v429 = vsel %vm41, %v395, 0
    %v432 = vsel %vm41, %v396, 0
    %434 = vmatprep.subr.bf16.mxu0 0
    %435 = vmatpush1.bf16.msra.mxu0 0
    %436 = vmatprep.subr.bf16.mxu0 0
    %437 = vmatpush1.bf16.msra.mxu0 0
    %438 = vmatprep.subr.bf16.mxu0 0
    %439 = vmatpush1.bf16.msra.mxu0 0
    %440 = vmatprep.subr.bf16.mxu0 0
    %441 = vmatpush1.bf16.msra.mxu0 0
    %442 = vmatprep.subr.bf16.mxu0 0
    %443 = vmatpush1.bf16.msra.mxu0 0
    %444 = vmatprep.subr.bf16.mxu0 0
    %445 = vmatpush1.bf16.msra.mxu0 0
    %446 = vmatprep.subr.bf16.mxu0 0
    %447 = vmatpush1.bf16.msra.mxu0 0
    %448 = vmatprep.subr.bf16.mxu0 0
    %449 = vmatpush1.bf16.msra.mxu0 %v408
    %450 = vmatprep.subr.bf16.mxu0 0
    %451 = vmatpush2.bf16.msra.mxu0 0
    %452 = vmatprep.subr.bf16.mxu0 0
    %453 = vmatpush2.bf16.msra.mxu0 0
    %454 = vmatprep.subr.bf16.mxu0 0
    %455 = vmatpush2.bf16.msra.mxu0 0
    %456 = vmatprep.subr.bf16.mxu0 0
    %457 = vmatpush2.bf16.msra.mxu0 0
    %458 = vmatprep.subr.bf16.mxu0 0
    %459 = vmatpush2.bf16.msra.mxu0 0
    %460 = vmatprep.subr.bf16.mxu0 0
    %461 = vmatpush2.bf16.msra.mxu0 0
    %462 = vmatprep.subr.bf16.mxu0 0
    %463 = vmatpush2.bf16.msra.mxu0 0
    %464 = vmatprep.subr.bf16.mxu0 0
    %465 = vmatpush2.bf16.msra.mxu0 0
    %466 = vmatprep.mubr.bf16.mxu0 0
    %467 = vmatmul.mubr.bf16.gmra.mxu0 %v411
    %v468 = vpop.f32.mrf.mxu0
    %v469 = vadd.f32 %v403, %v468
    %v470 = vpop.f32.mrf.mxu0
    %v471 = vpop.f32.mrf.mxu0
    %v472 = vadd.f32 %v403, %v471
    %v473 = vpop.f32.mrf.mxu0
    %474 = vmatprep.mubr.bf16.mxu0 0
    %475 = vmatmul.mubr.bf16.gmra.mxu0 %v414
    %v476 = vpop.f32.mrf.mxu0
    %v477 = vadd.f32 %v403, %v476
    %v478 = vpop.f32.mrf.mxu0
    %v479 = vpop.f32.mrf.mxu0
    %v480 = vadd.f32 %v403, %v479
    %v481 = vpop.f32.mrf.mxu0
    %482 = vmatprep.mubr.bf16.mxu0 0
    %483 = vmatmul.mubr.bf16.gmra.mxu0 %v417
    %v484 = vpop.f32.mrf.mxu0
    %v485 = vadd.f32 %v403, %v484
    %v486 = vpop.f32.mrf.mxu0
    %v487 = vpop.f32.mrf.mxu0
    %v488 = vadd.f32 %v403, %v487
    %v489 = vpop.f32.mrf.mxu0
    %490 = vmatprep.mubr.bf16.mxu0 0
    %491 = vmatmul.mubr.bf16.gmra.mxu0 %v420
    %v492 = vpop.f32.mrf.mxu0
    %v493 = vadd.f32 %v403, %v492
    %v494 = vpop.f32.mrf.mxu0
    %v495 = vpop.f32.mrf.mxu0
    %v496 = vadd.f32 %v403, %v495
    %v497 = vpop.f32.mrf.mxu0
    %498 = vmatprep.mubr.bf16.mxu0 0
    %499 = vmatmul.mubr.bf16.gmra.mxu0 %v423
    %v500 = vpop.f32.mrf.mxu0
    %v501 = vadd.f32 %v403, %v500
    %v502 = vpop.f32.mrf.mxu0
    %v503 = vpop.f32.mrf.mxu0
    %v504 = vadd.f32 %v403, %v503
    %v505 = vpop.f32.mrf.mxu0
    %506 = vmatprep.mubr.bf16.mxu0 0
    %507 = vmatmul.mubr.bf16.gmra.mxu0 %v426
    %v508 = vpop.f32.mrf.mxu0
    %v509 = vadd.f32 %v403, %v508
    %v510 = vpop.f32.mrf.mxu0
    %v511 = vpop.f32.mrf.mxu0
    %v512 = vadd.f32 %v403, %v511
    %v513 = vpop.f32.mrf.mxu0
    %514 = vmatprep.mubr.bf16.mxu0 0
    %515 = vmatmul.mubr.bf16.gmra.mxu0 %v429
    %v516 = vpop.f32.mrf.mxu0
    %v517 = vadd.f32 %v403, %v516
    %v518 = vpop.f32.mrf.mxu0
    %v519 = vpop.f32.mrf.mxu0
    %v520 = vadd.f32 %v403, %v519
    %v521 = vpop.f32.mrf.mxu0
    %522 = vmatprep.mubr.bf16.mxu0 0
    %523 = vmatmul.mubr.bf16.gmra.mxu0 %v432
    %v524 = vpop.f32.mrf.mxu0
    %v525 = vadd.f32 %v403, %v524
    %v526 = vpop.f32.mrf.mxu0
    %v527 = vpop.f32.mrf.mxu0
    %v528 = vadd.f32 %v403, %v527
    %v529 = vpop.f32.mrf.mxu0
    %530 = vdwg.mxu0
    %v531 = vmax.f32 %v469, 0.0
    %v532 = vmax.f32 %v472, 0.0
    %v533 = vmax.f32 %v477, 0.0
    %v534 = vmax.f32 %v480, 0.0
    %v535 = vmax.f32 %v485, 0.0
    %v536 = vmax.f32 %v488, 0.0
    %v537 = vmax.f32 %v493, 0.0
    %v538 = vmax.f32 %v496, 0.0
    %v539 = vmax.f32 %v501, 0.0
    %v540 = vmax.f32 %v504, 0.0
    %v541 = vmax.f32 %v509, 0.0
    %v542 = vmax.f32 %v512, 0.0
    %v543 = vmax.f32 %v517, 0.0
    %v544 = vmax.f32 %v520, 0.0
    %v545 = vmax.f32 %v525, 0.0
    %v546 = vmax.f32 %v528, 0.0
    %v547 = vpack.c.bf16 %v532, %v531
    %v548 = vpack.c.bf16 %v534, %v533
    %v549 = vpack.c.bf16 %v536, %v535
    %v550 = vpack.c.bf16 %v538, %v537
    %v551 = vpack.c.bf16 %v540, %v539
    %v552 = vpack.c.bf16 %v542, %v541
    %v553 = vpack.c.bf16 %v544, %v543
    %v554 = vpack.c.bf16 %v546, %v545
    %v555 = vld [vmem:[%s4 + $0x30] sm:$0xf]
    %v556 = vld [vmem:[%s4 + $0x34] sm:$0xf]
    %v557 = vld [vmem:[%s4 + $0x38] sm:$0xf]
    %v558 = vld [vmem:[%s4 + $0x3c] sm:$0xf]
    %v559 = vld [vmem:[%s5 + $0x5] sm:$0x1]
    %v560 = vlaneseq
    %v561 = vshrl.u32 %v560, 7
    %v562 = vsub.s32 0, %v561
    %v563 = vrot.slane %v559, %v562
    %v568 = vunpack.c.l.b16 %v555
    %v569 = vunpack.c.l.b16 %v556
    %v570 = vunpack.c.l.b16 %v557
    %v571 = vunpack.c.l.b16 %v558
    %v572 = vpack.c.b16 %v569, %v568
    %v573 = vpack.c.b16 %v571, %v570
    %v577 = vsel %vm170, %v547, 0
    %v580 = vsel %vm170, %v548, 0
    %v583 = vsel %vm170, %v549, 0
    %v586 = vsel %vm170, %v550, 0
    %v589 = vsel %vm170, %v551, 0
    %v592 = vsel %vm170, %v552, 0
    %v595 = vsel %vm170, %v553, 0
    %v598 = vsel %vm170, %v554, 0
    %600 = vmatprep.subr.bf16.mxu0 0
    %601 = vmatpush1.bf16.msra.mxu0 0
    %602 = vmatprep.subr.bf16.mxu0 0
    %603 = vmatpush1.bf16.msra.mxu0 0
    %604 = vmatprep.subr.bf16.mxu0 0
    %605 = vmatpush1.bf16.msra.mxu0 0
    %606 = vmatprep.subr.bf16.mxu0 0
    %607 = vmatpush1.bf16.msra.mxu0 0
    %608 = vmatprep.subr.bf16.mxu0 0
    %609 = vmatpush1.bf16.msra.mxu0 0
    %610 = vmatprep.subr.bf16.mxu0 0
    %611 = vmatpush1.bf16.msra.mxu0 0
    %612 = vmatprep.subr.bf16.mxu0 0
    %613 = vmatpush1.bf16.msra.mxu0 %v573
    %614 = vmatprep.subr.bf16.mxu0 0
    %615 = vmatpush1.bf16.msra.mxu0 %v572
    %616 = vmatprep.subr.bf16.mxu0 0
    %617 = vmatpush2.bf16.msra.mxu0 0
    %618 = vmatprep.subr.bf16.mxu0 0
    %619 = vmatpush2.bf16.msra.mxu0 0
    %620 = vmatprep.subr.bf16.mxu0 0
    %621 = vmatpush2.bf16.msra.mxu0 0
    %622 = vmatprep.subr.bf16.mxu0 0
    %623 = vmatpush2.bf16.msra.mxu0 0
    %624 = vmatprep.subr.bf16.mxu0 0
    %625 = vmatpush2.bf16.msra.mxu0 0
    %626 = vmatprep.subr.bf16.mxu0 0
    %627 = vmatpush2.bf16.msra.mxu0 0
    %628 = vmatprep.subr.bf16.mxu0 0
    %629 = vmatpush2.bf16.msra.mxu0 0
    %630 = vmatprep.subr.bf16.mxu0 0
    %631 = vmatpush2.bf16.msra.mxu0 0
    %632 = vmatprep.mubr.bf16.mxu0 0
    %633 = vmatmul.mubr.bf16.gmra.mxu0 %v577
    %v634 = vpop.f32.mrf.mxu0
    %v635 = vadd.f32 %v563, %v634
    %v636 = vpop.f32.mrf.mxu0
    %v637 = vpop.f32.mrf.mxu0
    %v638 = vadd.f32 %v563, %v637
    %v639 = vpop.f32.mrf.mxu0
    %640 = vmatprep.mubr.bf16.mxu0 0
    %641 = vmatmul.mubr.bf16.gmra.mxu0 %v580
    %v642 = vpop.f32.mrf.mxu0
    %v643 = vadd.f32 %v563, %v642
    %v644 = vpop.f32.mrf.mxu0
    %v645 = vpop.f32.mrf.mxu0
    %v646 = vadd.f32 %v563, %v645
    %v647 = vpop.f32.mrf.mxu0
    %648 = vmatprep.mubr.bf16.mxu0 0
    %649 = vmatmul.mubr.bf16.gmra.mxu0 %v583
    %v650 = vpop.f32.mrf.mxu0
    %v651 = vadd.f32 %v563, %v650
    %v652 = vpop.f32.mrf.mxu0
    %v653 = vpop.f32.mrf.mxu0
    %v654 = vadd.f32 %v563, %v653
    %v655 = vpop.f32.mrf.mxu0
    %656 = vmatprep.mubr.bf16.mxu0 0
    %657 = vmatmul.mubr.bf16.gmra.mxu0 %v586
    %v658 = vpop.f32.mrf.mxu0
    %v659 = vadd.f32 %v563, %v658
    %v660 = vpop.f32.mrf.mxu0
    %v661 = vpop.f32.mrf.mxu0
    %v662 = vadd.f32 %v563, %v661
    %v663 = vpop.f32.mrf.mxu0
    %664 = vmatprep.mubr.bf16.mxu0 0
    %665 = vmatmul.mubr.bf16.gmra.mxu0 %v589
    %v666 = vpop.f32.mrf.mxu0
    %v667 = vadd.f32 %v563, %v666
    %v668 = vpop.f32.mrf.mxu0
    %v669 = vpop.f32.mrf.mxu0
    %v670 = vadd.f32 %v563, %v669
    %v671 = vpop.f32.mrf.mxu0
    %672 = vmatprep.mubr.bf16.mxu0 0
    %673 = vmatmul.mubr.bf16.gmra.mxu0 %v592
    %v674 = vpop.f32.mrf.mxu0
    %v675 = vadd.f32 %v563, %v674
    %v676 = vpop.f32.mrf.mxu0
    %v677 = vpop.f32.mrf.mxu0
    %v678 = vadd.f32 %v563, %v677
    %v679 = vpop.f32.mrf.mxu0
    %680 = vmatprep.mubr.bf16.mxu0 0
    %681 = vmatmul.mubr.bf16.gmra.mxu0 %v595
    %v682 = vpop.f32.mrf.mxu0
    %v683 = vadd.f32 %v563, %v682
    %v684 = vpop.f32.mrf.mxu0
    %v685 = vpop.f32.mrf.mxu0
    %v686 = vadd.f32 %v563, %v685
    %v687 = vpop.f32.mrf.mxu0
    %688 = vmatprep.mubr.bf16.mxu0 0
    %689 = vmatmul.mubr.bf16.gmra.mxu0 %v598
    %v690 = vpop.f32.mrf.mxu0
    %v691 = vadd.f32 %v563, %v690
    %v692 = vpop.f32.mrf.mxu0
    %v693 = vpop.f32.mrf.mxu0
    %v694 = vadd.f32 %v563, %v693
    %v695 = vpop.f32.mrf.mxu0
    %696 = vdwg.mxu0
    %v697 = vld [vmem:[%s5 + $0xc] sm:$0x1]
    %v698 = vlaneseq
    %v699 = vshrl.u32 %v698, 7
    %v700 = vld [vmem:[%s2] sm:$0xff]
    %v701 = vld [vmem:[%s2 + $0x8] sm:$0xff]
    %v702 = vld [vmem:[%s2 + $0x10] sm:$0xff]
    %v703 = vld [vmem:[%s2 + $0x18] sm:$0xff]
    %v704 = vld [vmem:[%s2 + $0x20] sm:$0xff]
    %v705 = vld [vmem:[%s2 + $0x28] sm:$0xff]
    %v706 = vld [vmem:[%s2 + $0x30] sm:$0xff]
    %v707 = vld [vmem:[%s2 + $0x38] sm:$0xff]
    %v708 = vld [vmem:[%s2 + $0x40] sm:$0xff]
    %v709 = vld [vmem:[%s2 + $0x48] sm:$0xff]
    %v710 = vld [vmem:[%s2 + $0x50] sm:$0xff]
    %v711 = vld [vmem:[%s2 + $0x58] sm:$0xff]
    %v712 = vld [vmem:[%s2 + $0x60] sm:$0xff]
    %v713 = vld [vmem:[%s2 + $0x68] sm:$0xff]
    %v714 = vld [vmem:[%s2 + $0x70] sm:$0xff]
    %v715 = vld [vmem:[%s2 + $0x78] sm:$0xff]
    %vm716 = vcmp.gt.s32.totalorder %v699, 0
    %v717 = vsel %vm716, 1, 0
    %vm718 = vcmp.eq.s32.totalorder %v717, 1
    %v719 = vlaneseq
    %v720 = vshrl.u32 %v719, 7
    %v721 = vsub.s32 0, %v720
    %v722 = vrot.slane %v697, %v721
    %v723 = vsel %vm718, %v635, %v722
    %v724 = vsel %vm718, %v638, %v722
    %v725 = vsel %vm718, %v643, %v722
    %v726 = vsel %vm718, %v646, %v722
    %v727 = vsel %vm718, %v651, %v722
    %v728 = vsel %vm718, %v654, %v722
    %v729 = vsel %vm718, %v659, %v722
    %v730 = vsel %vm718, %v662, %v722
    %v731 = vsel %vm718, %v667, %v722
    %v732 = vsel %vm718, %v670, %v722
    %v733 = vsel %vm718, %v675, %v722
    %v734 = vsel %vm718, %v678, %v722
    %v735 = vsel %vm718, %v683, %v722
    %v736 = vsel %vm718, %v686, %v722
    %v737 = vsel %vm718, %v691, %v722
    %v738 = vsel %vm718, %v694, %v722
    %v739 = vadd.f32 %v700, %v723
    %v740 = vadd.f32 %v701, %v724
    %v741 = vadd.f32 %v702, %v725
    %v742 = vadd.f32 %v703, %v726
    %v743 = vadd.f32 %v704, %v727
    %v744 = vadd.f32 %v705, %v728
    %v745 = vadd.f32 %v706, %v729
    %v746 = vadd.f32 %v707, %v730
    %v747 = vadd.f32 %v708, %v731
    %v748 = vadd.f32 %v709, %v732
    %v749 = vadd.f32 %v710, %v733
    %v750 = vadd.f32 %v711, %v734
    %v751 = vadd.f32 %v712, %v735
    %v752 = vadd.f32 %v713, %v736
    %v753 = vadd.f32 %v714, %v737
    %v754 = vadd.f32 %v715, %v738
    %v755 = vpack.c.bf16 %v740, %v739
    %v756 = vpack.c.bf16 %v742, %v741
    %v757 = vpack.c.bf16 %v744, %v743
    %v758 = vpack.c.bf16 %v746, %v745
    %v759 = vpack.c.bf16 %v748, %v747
    %v760 = vpack.c.bf16 %v750, %v749
    %v761 = vpack.c.bf16 %v752, %v751
    %v762 = vpack.c.bf16 %v754, %v753
    %v763 = vld [vmem:[%s4 + $0x50] sm:$0xf]
    %v764 = vld [vmem:[%s4 + $0x54] sm:$0xf]
    %v765 = vld [vmem:[%s4 + $0x58] sm:$0xf]
    %v766 = vld [vmem:[%s4 + $0x5c] sm:$0xf]
    %v771 = vunpack.c.l.b16 %v763
    %v772 = vunpack.c.l.b16 %v764
    %v773 = vunpack.c.l.b16 %v765
    %v774 = vunpack.c.l.b16 %v766
    %v775 = vpack.c.b16 %v772, %v771
    %v776 = vpack.c.b16 %v774, %v773
    %v780 = vsel %vm170, %v755, 0
    %v783 = vsel %vm170, %v756, 0
    %v786 = vsel %vm170, %v757, 0
    %v789 = vsel %vm170, %v758, 0
    %v792 = vsel %vm170, %v759, 0
    %v795 = vsel %vm170, %v760, 0
    %v798 = vsel %vm170, %v761, 0
    %v801 = vsel %vm170, %v762, 0
    %803 = vmatprep.subr.bf16.mxu0 0
    %804 = vmatpush1.bf16.msra.mxu0 0
    %805 = vmatprep.subr.bf16.mxu0 0
    %806 = vmatpush1.bf16.msra.mxu0 0
    %807 = vmatprep.subr.bf16.mxu0 0
    %808 = vmatpush1.bf16.msra.mxu0 0
    %809 = vmatprep.subr.bf16.mxu0 0
    %810 = vmatpush1.bf16.msra.mxu0 0
    %811 = vmatprep.subr.bf16.mxu0 0
    %812 = vmatpush1.bf16.msra.mxu0 0
    %813 = vmatprep.subr.bf16.mxu0 0
    %814 = vmatpush1.bf16.msra.mxu0 0
    %815 = vmatprep.subr.bf16.mxu0 0
    %816 = vmatpush1.bf16.msra.mxu0 %v776
    %817 = vmatprep.subr.bf16.mxu0 0
    %818 = vmatpush1.bf16.msra.mxu0 %v775
    %819 = vmatprep.subr.bf16.mxu0 0
    %820 = vmatpush2.bf16.msra.mxu0 0
    %821 = vmatprep.subr.bf16.mxu0 0
    %822 = vmatpush2.bf16.msra.mxu0 0
    %823 = vmatprep.subr.bf16.mxu0 0
    %824 = vmatpush2.bf16.msra.mxu0 0
    %825 = vmatprep.subr.bf16.mxu0 0
    %826 = vmatpush2.bf16.msra.mxu0 0
    %827 = vmatprep.subr.bf16.mxu0 0
    %828 = vmatpush2.bf16.msra.mxu0 0
    %829 = vmatprep.subr.bf16.mxu0 0
    %830 = vmatpush2.bf16.msra.mxu0 0
    %831 = vmatprep.subr.bf16.mxu0 0
    %832 = vmatpush2.bf16.msra.mxu0 0
    %833 = vmatprep.subr.bf16.mxu0 0
    %834 = vmatpush2.bf16.msra.mxu0 0
    %835 = vmatprep.mubr.bf16.mxu0 0
    %836 = vmatmul.mubr.bf16.gmra.mxu0 %v780
    %v837 = vpop.f32.mrf.mxu0
    %v838 = vadd.f32 0.0, %v837
    %v839 = vpop.f32.mrf.mxu0
    %v840 = vpop.f32.mrf.mxu0
    %v841 = vadd.f32 0.0, %v840
    %v842 = vpop.f32.mrf.mxu0
    %843 = vmatprep.mubr.bf16.mxu0 0
    %844 = vmatmul.mubr.bf16.gmra.mxu0 %v783
    %v845 = vpop.f32.mrf.mxu0
    %v846 = vadd.f32 0.0, %v845
    %v847 = vpop.f32.mrf.mxu0
    %v848 = vpop.f32.mrf.mxu0
    %v849 = vadd.f32 0.0, %v848
    %v850 = vpop.f32.mrf.mxu0
    %851 = vmatprep.mubr.bf16.mxu0 0
    %852 = vmatmul.mubr.bf16.gmra.mxu0 %v786
    %v853 = vpop.f32.mrf.mxu0
    %v854 = vadd.f32 0.0, %v853
    %v855 = vpop.f32.mrf.mxu0
    %v856 = vpop.f32.mrf.mxu0
    %v857 = vadd.f32 0.0, %v856
    %v858 = vpop.f32.mrf.mxu0
    %859 = vmatprep.mubr.bf16.mxu0 0
    %860 = vmatmul.mubr.bf16.gmra.mxu0 %v789
    %v861 = vpop.f32.mrf.mxu0
    %v862 = vadd.f32 0.0, %v861
    %v863 = vpop.f32.mrf.mxu0
    %v864 = vpop.f32.mrf.mxu0
    %v865 = vadd.f32 0.0, %v864
    %v866 = vpop.f32.mrf.mxu0
    %867 = vmatprep.mubr.bf16.mxu0 0
    %868 = vmatmul.mubr.bf16.gmra.mxu0 %v792
    %v869 = vpop.f32.mrf.mxu0
    %v870 = vadd.f32 0.0, %v869
    %v871 = vpop.f32.mrf.mxu0
    %v872 = vpop.f32.mrf.mxu0
    %v873 = vadd.f32 0.0, %v872
    %v874 = vpop.f32.mrf.mxu0
    %875 = vmatprep.mubr.bf16.mxu0 0
    %876 = vmatmul.mubr.bf16.gmra.mxu0 %v795
    %v877 = vpop.f32.mrf.mxu0
    %v878 = vadd.f32 0.0, %v877
    %v879 = vpop.f32.mrf.mxu0
    %v880 = vpop.f32.mrf.mxu0
    %v881 = vadd.f32 0.0, %v880
    %v882 = vpop.f32.mrf.mxu0
    %883 = vmatprep.mubr.bf16.mxu0 0
    %884 = vmatmul.mubr.bf16.gmra.mxu0 %v798
    %v885 = vpop.f32.mrf.mxu0
    %v886 = vadd.f32 0.0, %v885
    %v887 = vpop.f32.mrf.mxu0
    %v888 = vpop.f32.mrf.mxu0
    %v889 = vadd.f32 0.0, %v888
    %v890 = vpop.f32.mrf.mxu0
    %891 = vmatprep.mubr.bf16.mxu0 0
    %892 = vmatmul.mubr.bf16.gmra.mxu0 %v801
    %v893 = vpop.f32.mrf.mxu0
    %v894 = vadd.f32 0.0, %v893
    %v895 = vpop.f32.mrf.mxu0
    %v896 = vpop.f32.mrf.mxu0
    %v897 = vadd.f32 0.0, %v896
    %v898 = vpop.f32.mrf.mxu0
    %899 = vdwg.mxu0
    %v900 = vpack.c.bf16 %v722, %v722
    %v901 = vld [vmem:[%s4 + $0x40] sm:$0xf]
    %v902 = vld [vmem:[%s4 + $0x44] sm:$0xf]
    %v903 = vld [vmem:[%s4 + $0x48] sm:$0xf]
    %v904 = vld [vmem:[%s4 + $0x4c] sm:$0xf]
    %v909 = vunpack.c.l.b16 %v901
    %v910 = vunpack.c.l.b16 %v902
    %v911 = vunpack.c.l.b16 %v903
    %v912 = vunpack.c.l.b16 %v904
    %v913 = vpack.c.b16 %v910, %v909
    %v914 = vpack.c.b16 %v912, %v911
    %v918 = vsel %vm170, %v900, 0
    %920 = vmatprep.subr.bf16.mxu0 0
    %921 = vmatpush1.bf16.msra.mxu0 0
    %922 = vmatprep.subr.bf16.mxu0 0
    %923 = vmatpush1.bf16.msra.mxu0 0
    %924 = vmatprep.subr.bf16.mxu0 0
    %925 = vmatpush1.bf16.msra.mxu0 0
    %926 = vmatprep.subr.bf16.mxu0 0
    %927 = vmatpush1.bf16.msra.mxu0 0
    %928 = vmatprep.subr.bf16.mxu0 0
    %929 = vmatpush1.bf16.msra.mxu0 0
    %930 = vmatprep.subr.bf16.mxu0 0
    %931 = vmatpush1.bf16.msra.mxu0 0
    %932 = vmatprep.subr.bf16.mxu0 0
    %933 = vmatpush1.bf16.msra.mxu0 %v914
    %934 = vmatprep.subr.bf16.mxu0 0
    %935 = vmatpush1.bf16.msra.mxu0 %v913
    %936 = vmatprep.subr.bf16.mxu0 0
    %937 = vmatpush2.bf16.msra.mxu0 0
    %938 = vmatprep.subr.bf16.mxu0 0
    %939 = vmatpush2.bf16.msra.mxu0 0
    %940 = vmatprep.subr.bf16.mxu0 0
    %941 = vmatpush2.bf16.msra.mxu0 0
    %942 = vmatprep.subr.bf16.mxu0 0
    %943 = vmatpush2.bf16.msra.mxu0 0
    %944 = vmatprep.subr.bf16.mxu0 0
    %945 = vmatpush2.bf16.msra.mxu0 0
    %946 = vmatprep.subr.bf16.mxu0 0
    %947 = vmatpush2.bf16.msra.mxu0 0
    %948 = vmatprep.subr.bf16.mxu0 0
    %949 = vmatpush2.bf16.msra.mxu0 0
    %950 = vmatprep.subr.bf16.mxu0 0
    %951 = vmatpush2.bf16.msra.mxu0 0
    %952 = vmatprep.mubr.bf16.mxu0 0
    %953 = vmatmul.mubr.bf16.gmra.mxu0 %v918
    %v954 = vpop.f32.mrf.mxu0
    %v955 = vadd.f32 0.0, %v954
    %v956 = vpop.f32.mrf.mxu0
    %v957 = vpop.f32.mrf.mxu0
    %v958 = vadd.f32 0.0, %v957
    %v959 = vpop.f32.mrf.mxu0
    %960 = vdwg.mxu0
    %v963 = vcombine.high %v955, %v955
    %v965 = vunpack.c.l.s4 1966171168
    %v966 = vunpack.c.0.s8 %v965
    %v967 = vlaneseq
    %v968 = vshrl.u32 %v967, 7
    %v969 = vsub.s32 %v966, %v968
    %v970 = vrot.slane %v955, %v969
    %v972 = vunpack.c.l.s4 1966171168
    %v973 = vunpack.c.0.s8 %v972
    %v974 = vlaneseq
    %v975 = vshrl.u32 %v974, 7
    %v976 = vsub.s32 %v973, %v975
    %v977 = vrot.slane %v963, %v976
    %v978 = vcombine.high %v970, %v970
    %v979 = vcombine.high %v977, %v977
    %v981 = vunpack.c.l.s4 1966171168
    %v982 = vunpack.c.0.s8 %v981
    %v983 = vlaneseq
    %v984 = vshrl.u32 %v983, 7
    %v985 = vsub.s32 %v982, %v984
    %v986 = vrot.slane %v970, %v985
    %v988 = vunpack.c.l.s4 1966171168
    %v989 = vunpack.c.0.s8 %v988
    %v990 = vlaneseq
    %v991 = vshrl.u32 %v990, 7
    %v992 = vsub.s32 %v989, %v991
    %v993 = vrot.slane %v977, %v992
    %v995 = vunpack.c.l.s4 1966171168
    %v996 = vunpack.c.0.s8 %v995
    %v997 = vlaneseq
    %v998 = vshrl.u32 %v997, 7
    %v999 = vsub.s32 %v996, %v998
    %v1000 = vrot.slane %v978, %v999
    %v1002 = vunpack.c.l.s4 1966171168
    %v1003 = vunpack.c.0.s8 %v1002
    %v1004 = vlaneseq
    %v1005 = vshrl.u32 %v1004, 7
    %v1006 = vsub.s32 %v1003, %v1005
    %v1007 = vrot.slane %v979, %v1006
    %v1008 = vcombine.high %v986, %v986
    %v1009 = vcombine.high %v993, %v993
    %v1010 = vcombine.high %v1000, %v1000
    %v1011 = vcombine.high %v1007, %v1007
    %v1012 = vcombine.high %v958, %v958
    %v1014 = vunpack.c.l.s4 1966171168
    %v1015 = vunpack.c.0.s8 %v1014
    %v1016 = vlaneseq
    %v1017 = vshrl.u32 %v1016, 7
    %v1018 = vsub.s32 %v1015, %v1017
    %v1019 = vrot.slane %v958, %v1018
    %v1021 = vunpack.c.l.s4 1966171168
    %v1022 = vunpack.c.0.s8 %v1021
    %v1023 = vlaneseq
    %v1024 = vshrl.u32 %v1023, 7
    %v1025 = vsub.s32 %v1022, %v1024
    %v1026 = vrot.slane %v1012, %v1025
    %v1027 = vcombine.high %v1019, %v1019
    %v1028 = vcombine.high %v1026, %v1026
    %v1030 = vunpack.c.l.s4 1966171168
    %v1031 = vunpack.c.0.s8 %v1030
    %v1032 = vlaneseq
    %v1033 = vshrl.u32 %v1032, 7
    %v1034 = vsub.s32 %v1031, %v1033
    %v1035 = vrot.slane %v1019, %v1034
    %v1037 = vunpack.c.l.s4 1966171168
    %v1038 = vunpack.c.0.s8 %v1037
    %v1039 = vlaneseq
    %v1040 = vshrl.u32 %v1039, 7
    %v1041 = vsub.s32 %v1038, %v1040
    %v1042 = vrot.slane %v1026, %v1041
    %v1044 = vunpack.c.l.s4 1966171168
    %v1045 = vunpack.c.0.s8 %v1044
    %v1046 = vlaneseq
    %v1047 = vshrl.u32 %v1046, 7
    %v1048 = vsub.s32 %v1045, %v1047
    %v1049 = vrot.slane %v1027, %v1048
    %v1051 = vunpack.c.l.s4 1966171168
    %v1052 = vunpack.c.0.s8 %v1051
    %v1053 = vlaneseq
    %v1054 = vshrl.u32 %v1053, 7
    %v1055 = vsub.s32 %v1052, %v1054
    %v1056 = vrot.slane %v1028, %v1055
    %v1057 = vcombine.high %v1035, %v1035
    %v1058 = vcombine.high %v1042, %v1042
    %v1059 = vcombine.high %v1049, %v1049
    %v1060 = vcombine.high %v1056, %v1056
    %v1061 = vlaneseq
    %v1062 = vshrl.u32 %v1061, 7
    %v1063 = vsub.s32 0, %v1062
    %v1064 = vrot.slane %v986, %v1063
    %v1065 = vlaneseq
    %v1066 = vshrl.u32 %v1065, 7
    %v1067 = vsub.s32 0, %v1066
    %v1068 = vrot.slane %v1000, %v1067
    %v1069 = vlaneseq
    %v1070 = vshrl.u32 %v1069, 7
    %v1071 = vsub.s32 0, %v1070
    %v1072 = vrot.slane %v1008, %v1071
    %v1073 = vlaneseq
    %v1074 = vshrl.u32 %v1073, 7
    %v1075 = vsub.s32 0, %v1074
    %v1076 = vrot.slane %v1010, %v1075
    %v1077 = vlaneseq
    %v1078 = vshrl.u32 %v1077, 7
    %v1079 = vsub.s32 0, %v1078
    %v1080 = vrot.slane %v993, %v1079
    %v1081 = vlaneseq
    %v1082 = vshrl.u32 %v1081, 7
    %v1083 = vsub.s32 0, %v1082
    %v1084 = vrot.slane %v1007, %v1083
    %v1085 = vlaneseq
    %v1086 = vshrl.u32 %v1085, 7
    %v1087 = vsub.s32 0, %v1086
    %v1088 = vrot.slane %v1009, %v1087
    %v1089 = vlaneseq
    %v1090 = vshrl.u32 %v1089, 7
    %v1091 = vsub.s32 0, %v1090
    %v1092 = vrot.slane %v1011, %v1091
    %v1093 = vlaneseq
    %v1094 = vshrl.u32 %v1093, 7
    %v1095 = vsub.s32 0, %v1094
    %v1096 = vrot.slane %v1035, %v1095
    %v1097 = vlaneseq
    %v1098 = vshrl.u32 %v1097, 7
    %v1099 = vsub.s32 0, %v1098
    %v1100 = vrot.slane %v1049, %v1099
    %v1101 = vlaneseq
    %v1102 = vshrl.u32 %v1101, 7
    %v1103 = vsub.s32 0, %v1102
    %v1104 = vrot.slane %v1057, %v1103
    %v1105 = vlaneseq
    %v1106 = vshrl.u32 %v1105, 7
    %v1107 = vsub.s32 0, %v1106
    %v1108 = vrot.slane %v1059, %v1107
    %v1109 = vlaneseq
    %v1110 = vshrl.u32 %v1109, 7
    %v1111 = vsub.s32 0, %v1110
    %v1112 = vrot.slane %v1042, %v1111
    %v1113 = vlaneseq
    %v1114 = vshrl.u32 %v1113, 7
    %v1115 = vsub.s32 0, %v1114
    %v1116 = vrot.slane %v1056, %v1115
    %v1117 = vlaneseq
    %v1118 = vshrl.u32 %v1117, 7
    %v1119 = vsub.s32 0, %v1118
    %v1120 = vrot.slane %v1058, %v1119
    %v1121 = vlaneseq
    %v1122 = vshrl.u32 %v1121, 7
    %v1123 = vsub.s32 0, %v1122
    %v1124 = vrot.slane %v1060, %v1123
    %v1141 = vadd.s32 %v699, 8
    %v1142 = vadd.s32 %v699, 16
    %v1143 = vadd.s32 %v699, 24
    %v1144 = vlaneseq
    %v1145 = vand.u32 %v1144, 127
    %v1146 = vmul.u32 %v1145, 8
    %vm1147 = vcmp.ge.s32.totalorder %v699, %v1146
    %vm1148 = vcmp.ge.s32.totalorder %v1141, %v1146
    %vm1149 = vcmp.ge.s32.totalorder %v1142, %v1146
    %vm1150 = vcmp.ge.s32.totalorder %v1143, %v1146
    %v1151 = vadd.s32 %v1145, 1
    %v1152 = vmul.u32 %v1151, 8
    %vm1153 = vcmp.lt.s32.totalorder %v699, %v1152
    %vm1154 = vcmp.lt.s32.totalorder %v1141, %v1152
    %vm1155 = vcmp.lt.s32.totalorder %v1142, %v1152
    %vm1156 = vcmp.lt.s32.totalorder %v1143, %v1152
    %vm1157 = vmand %vm1147, %vm1153
    %vm1158 = vmand %vm1148, %vm1154
    %vm1159 = vmand %vm1149, %vm1155
    %vm1160 = vmand %vm1150, %vm1156
    %v1161 = vsel %vm1157, 1, 0
    %v1162 = vsel %vm1158, 1, 0
    %v1163 = vsel %vm1159, 1, 0
    %v1164 = vsel %vm1160, 1, 0
    %v1165 = vcvt.s32.f32 %v1161
    %v1166 = vcvt.s32.f32 %v1162
    %v1167 = vcvt.s32.f32 %v1163
    %v1168 = vcvt.s32.f32 %v1164
    %v1169 = vmul.f32 %v1064, %v838
    %v1170 = vmul.f32 %v1068, %v841
    %v1171 = vmul.f32 %v1072, %v846
    %v1172 = vmul.f32 %v1076, %v849
    %v1173 = vmul.f32 %v1080, %v854
    %v1174 = vmul.f32 %v1084, %v857
    %v1175 = vmul.f32 %v1088, %v862
    %v1176 = vmul.f32 %v1092, %v865
    %v1177 = vmul.f32 %v1096, %v870
    %v1178 = vmul.f32 %v1100, %v873
    %v1179 = vmul.f32 %v1104, %v878
    %v1180 = vmul.f32 %v1108, %v881
    %v1181 = vmul.f32 %v1112, %v886
    %v1182 = vmul.f32 %v1116, %v889
    %v1183 = vmul.f32 %v1120, %v894
    %v1184 = vmul.f32 %v1124, %v897
    %v1186 = vsel %vm170, %v1169, 0
    %v1189 = vsel %vm170, %v1170, 0
    %v1192 = vsel %vm170, %v1171, 0
    %v1195 = vsel %vm170, %v1172, 0
    %v1198 = vsel %vm170, %v1173, 0
    %v1201 = vsel %vm170, %v1174, 0
    %v1204 = vsel %vm170, %v1175, 0
    %v1207 = vsel %vm170, %v1176, 0
    %v1210 = vsel %vm170, %v1177, 0
    %v1213 = vsel %vm170, %v1178, 0
    %v1216 = vsel %vm170, %v1179, 0
    %v1219 = vsel %vm170, %v1180, 0
    %v1222 = vsel %vm170, %v1181, 0
    %v1225 = vsel %vm170, %v1182, 0
    %v1228 = vsel %vm170, %v1183, 0
    %v1231 = vsel %vm170, %v1184, 0
    %1233 = vmatprep.subr.mxu0 0.0
    %1234 = vmatpush1.msra.mxu0 0.0
    %1235 = vmatprep.subr.mxu0 0.0
    %1236 = vmatpush1.msra.mxu0 0.0
    %1237 = vmatprep.subr.mxu0 0.0
    %1238 = vmatpush1.msra.mxu0 0.0
    %1239 = vmatprep.subr.mxu0 0.0
    %1240 = vmatpush1.msra.mxu0 0.0
    %1241 = vmatprep.subr.mxu0 0.0
    %1242 = vmatpush1.msra.mxu0 0.0
    %1243 = vmatprep.subr.mxu0 0.0
    %1244 = vmatpush1.msra.mxu0 0.0
    %1245 = vmatprep.subr.mxu0 0.0
    %1246 = vmatpush1.msra.mxu0 0.0
    %1247 = vmatprep.subr.mxu0 0.0
    %1248 = vmatpush1.msra.mxu0 0.0
    %1249 = vmatprep.subr.mxu0 0.0
    %1250 = vmatpush1.msra.mxu0 0.0
    %1251 = vmatprep.subr.mxu0 0.0
    %1252 = vmatpush1.msra.mxu0 0.0
    %1253 = vmatprep.subr.mxu0 0.0
    %1254 = vmatpush1.msra.mxu0 0.0
    %1255 = vmatprep.subr.mxu0 0.0
    %1256 = vmatpush1.msra.mxu0 0.0
    %1257 = vmatprep.subr.mxu0 0.0
    %1258 = vmatpush1.msra.mxu0 %v1168
    %1259 = vmatprep.subr.mxu0 0.0
    %1260 = vmatpush1.msra.mxu0 %v1167
    %1261 = vmatprep.subr.mxu0 0.0
    %1262 = vmatpush1.msra.mxu0 %v1166
    %1263 = vmatprep.subr.mxu0 0.0
    %1264 = vmatpush1.msra.mxu0 %v1165
    %1265 = vmatprep.subr.mxu0 0.0
    %1266 = vmatpush2.msra.mxu0 0.0
    %1267 = vmatprep.subr.mxu0 0.0
    %1268 = vmatpush2.msra.mxu0 0.0
    %1269 = vmatprep.subr.mxu0 0.0
    %1270 = vmatpush2.msra.mxu0 0.0
    %1271 = vmatprep.subr.mxu0 0.0
    %1272 = vmatpush2.msra.mxu0 0.0
    %1273 = vmatprep.subr.mxu0 0.0
    %1274 = vmatpush2.msra.mxu0 0.0
    %1275 = vmatprep.subr.mxu0 0.0
    %1276 = vmatpush2.msra.mxu0 0.0
    %1277 = vmatprep.subr.mxu0 0.0
    %1278 = vmatpush2.msra.mxu0 0.0
    %1279 = vmatprep.subr.mxu0 0.0
    %1280 = vmatpush2.msra.mxu0 0.0
    %1281 = vmatprep.subr.mxu0 0.0
    %1282 = vmatpush2.msra.mxu0 0.0
    %1283 = vmatprep.subr.mxu0 0.0
    %1284 = vmatpush2.msra.mxu0 0.0
    %1285 = vmatprep.subr.mxu0 0.0
    %1286 = vmatpush2.msra.mxu0 0.0
    %1287 = vmatprep.subr.mxu0 0.0
    %1288 = vmatpush2.msra.mxu0 0.0
    %1289 = vmatprep.subr.mxu0 0.0
    %1290 = vmatpush2.msra.mxu0 0.0
    %1291 = vmatprep.subr.mxu0 0.0
    %1292 = vmatpush2.msra.mxu0 0.0
    %1293 = vmatprep.subr.mxu0 0.0
    %1294 = vmatpush2.msra.mxu0 0.0
    %1295 = vmatprep.subr.mxu0 0.0
    %1296 = vmatpush2.msra.mxu0 0.0
    %1297 = vmatprep.mubr.f32.mxu0 0.0
    %1298 = vmatmul.mubr.f32.gmra.mxu0 %v1186
    %v1299 = vpop.f32.mrf.mxu0
    %v1300 = vadd.f32 0.0, %v1299
    %v1301 = vpop.f32.mrf.mxu0
    %1302 = vmatprep.mubr.f32.mxu0 0.0
    %1303 = vmatmul.mubr.f32.gmra.mxu0 %v1189
    %v1304 = vpop.f32.mrf.mxu0
    %v1305 = vadd.f32 0.0, %v1304
    %v1306 = vpop.f32.mrf.mxu0
    %1307 = vmatprep.mubr.f32.mxu0 0.0
    %1308 = vmatmul.mubr.f32.gmra.mxu0 %v1192
    %v1309 = vpop.f32.mrf.mxu0
    %v1310 = vadd.f32 0.0, %v1309
    %v1311 = vpop.f32.mrf.mxu0
    %1312 = vmatprep.mubr.f32.mxu0 0.0
    %1313 = vmatmul.mubr.f32.gmra.mxu0 %v1195
    %v1314 = vpop.f32.mrf.mxu0
    %v1315 = vadd.f32 0.0, %v1314
    %v1316 = vpop.f32.mrf.mxu0
    %1317 = vmatprep.mubr.f32.mxu0 0.0
    %1318 = vmatmul.mubr.f32.gmra.mxu0 %v1198
    %v1319 = vpop.f32.mrf.mxu0
    %v1320 = vadd.f32 0.0, %v1319
    %v1321 = vpop.f32.mrf.mxu0
    %1322 = vmatprep.mubr.f32.mxu0 0.0
    %1323 = vmatmul.mubr.f32.gmra.mxu0 %v1201
    %v1324 = vpop.f32.mrf.mxu0
    %v1325 = vadd.f32 0.0, %v1324
    %v1326 = vpop.f32.mrf.mxu0
    %1327 = vmatprep.mubr.f32.mxu0 0.0
    %1328 = vmatmul.mubr.f32.gmra.mxu0 %v1204
    %v1329 = vpop.f32.mrf.mxu0
    %v1330 = vadd.f32 0.0, %v1329
    %v1331 = vpop.f32.mrf.mxu0
    %1332 = vmatprep.mubr.f32.mxu0 0.0
    %1333 = vmatmul.mubr.f32.gmra.mxu0 %v1207
    %v1334 = vpop.f32.mrf.mxu0
    %v1335 = vadd.f32 0.0, %v1334
    %v1336 = vpop.f32.mrf.mxu0
    %1337 = vmatprep.mubr.f32.mxu0 0.0
    %1338 = vmatmul.mubr.f32.gmra.mxu0 %v1210
    %v1339 = vpop.f32.mrf.mxu0
    %v1340 = vadd.f32 0.0, %v1339
    %v1341 = vpop.f32.mrf.mxu0
    %1342 = vmatprep.mubr.f32.mxu0 0.0
    %1343 = vmatmul.mubr.f32.gmra.mxu0 %v1213
    %v1344 = vpop.f32.mrf.mxu0
    %v1345 = vadd.f32 0.0, %v1344
    %v1346 = vpop.f32.mrf.mxu0
    %1347 = vmatprep.mubr.f32.mxu0 0.0
    %1348 = vmatmul.mubr.f32.gmra.mxu0 %v1216
    %v1349 = vpop.f32.mrf.mxu0
    %v1350 = vadd.f32 0.0, %v1349
    %v1351 = vpop.f32.mrf.mxu0
    %1352 = vmatprep.mubr.f32.mxu0 0.0
    %1353 = vmatmul.mubr.f32.gmra.mxu0 %v1219
    %v1354 = vpop.f32.mrf.mxu0
    %v1355 = vadd.f32 0.0, %v1354
    %v1356 = vpop.f32.mrf.mxu0
    %1357 = vmatprep.mubr.f32.mxu0 0.0
    %1358 = vmatmul.mubr.f32.gmra.mxu0 %v1222
    %v1359 = vpop.f32.mrf.mxu0
    %v1360 = vadd.f32 0.0, %v1359
    %v1361 = vpop.f32.mrf.mxu0
    %1362 = vmatprep.mubr.f32.mxu0 0.0
    %1363 = vmatmul.mubr.f32.gmra.mxu0 %v1225
    %v1364 = vpop.f32.mrf.mxu0
    %v1365 = vadd.f32 0.0, %v1364
    %v1366 = vpop.f32.mrf.mxu0
    %1367 = vmatprep.mubr.f32.mxu0 0.0
    %1368 = vmatmul.mubr.f32.gmra.mxu0 %v1228
    %v1369 = vpop.f32.mrf.mxu0
    %v1370 = vadd.f32 0.0, %v1369
    %v1371 = vpop.f32.mrf.mxu0
    %1372 = vmatprep.mubr.f32.mxu0 0.0
    %1373 = vmatmul.mubr.f32.gmra.mxu0 %v1231
    %v1374 = vpop.f32.mrf.mxu0
    %v1375 = vadd.f32 0.0, %v1374
    %v1376 = vpop.f32.mrf.mxu0
    %1377 = vdwg.mxu0
    %v1378 = vld [vmem:[%s3] sm:$0xff]
    %v1379 = vld [vmem:[%s3 + $0x8] sm:$0xff]
    %v1380 = vld [vmem:[%s3 + $0x10] sm:$0xff]
    %v1381 = vld [vmem:[%s3 + $0x18] sm:$0xff]
    %v1382 = vld [vmem:[%s3 + $0x20] sm:$0xff]
    %v1383 = vld [vmem:[%s3 + $0x28] sm:$0xff]
    %v1384 = vld [vmem:[%s3 + $0x30] sm:$0xff]
    %v1385 = vld [vmem:[%s3 + $0x38] sm:$0xff]
    %v1386 = vld [vmem:[%s3 + $0x40] sm:$0xff]
    %v1387 = vld [vmem:[%s3 + $0x48] sm:$0xff]
    %v1388 = vld [vmem:[%s3 + $0x50] sm:$0xff]
    %v1389 = vld [vmem:[%s3 + $0x58] sm:$0xff]
    %v1390 = vld [vmem:[%s3 + $0x60] sm:$0xff]
    %v1391 = vld [vmem:[%s3 + $0x68] sm:$0xff]
    %v1392 = vld [vmem:[%s3 + $0x70] sm:$0xff]
    %v1393 = vld [vmem:[%s3 + $0x78] sm:$0xff]
    %1395 = vset.pattern.permute.xlu0 0
    %1396 = vperm.xlu0 %1395, %v1378
    %v1397 = vpop.permute.xlu0 %1396
    %1400 = vset.pattern.permute.xlu0 0
    %1401 = vperm.xlu0 %1400, %v1379
    %v1402 = vpop.permute.xlu0 %1401
    %1405 = vset.pattern.permute.xlu0 0
    %1406 = vperm.xlu0 %1405, %v1380
    %v1407 = vpop.permute.xlu0 %1406
    %1410 = vset.pattern.permute.xlu0 0
    %1411 = vperm.xlu0 %1410, %v1381
    %v1412 = vpop.permute.xlu0 %1411
    %1415 = vset.pattern.permute.xlu0 0
    %1416 = vperm.xlu0 %1415, %v1382
    %v1417 = vpop.permute.xlu0 %1416
    %1420 = vset.pattern.permute.xlu0 0
    %1421 = vperm.xlu0 %1420, %v1383
    %v1422 = vpop.permute.xlu0 %1421
    %1425 = vset.pattern.permute.xlu0 0
    %1426 = vperm.xlu0 %1425, %v1384
    %v1427 = vpop.permute.xlu0 %1426
    %1430 = vset.pattern.permute.xlu0 0
    %1431 = vperm.xlu0 %1430, %v1385
    %v1432 = vpop.permute.xlu0 %1431
    %1435 = vset.pattern.permute.xlu0 0
    %1436 = vperm.xlu0 %1435, %v1386
    %v1437 = vpop.permute.xlu0 %1436
    %1440 = vset.pattern.permute.xlu0 0
    %1441 = vperm.xlu0 %1440, %v1387
    %v1442 = vpop.permute.xlu0 %1441
    %1445 = vset.pattern.permute.xlu0 0
    %1446 = vperm.xlu0 %1445, %v1388
    %v1447 = vpop.permute.xlu0 %1446
    %1450 = vset.pattern.permute.xlu0 0
    %1451 = vperm.xlu0 %1450, %v1389
    %v1452 = vpop.permute.xlu0 %1451
    %1455 = vset.pattern.permute.xlu0 0
    %1456 = vperm.xlu0 %1455, %v1390
    %v1457 = vpop.permute.xlu0 %1456
    %1460 = vset.pattern.permute.xlu0 0
    %1461 = vperm.xlu0 %1460, %v1391
    %v1462 = vpop.permute.xlu0 %1461
    %1465 = vset.pattern.permute.xlu0 0
    %1466 = vperm.xlu0 %1465, %v1392
    %v1467 = vpop.permute.xlu0 %1466
    %1470 = vset.pattern.permute.xlu0 0
    %1471 = vperm.xlu0 %1470, %v1393
    %v1472 = vpop.permute.xlu0 %1471
    %v1474 = vadd.f32 %v1300, %v1397
    %v1475 = vadd.f32 %v1305, %v1402
    %v1476 = vadd.f32 %v1310, %v1407
    %v1477 = vadd.f32 %v1315, %v1412
    %v1478 = vadd.f32 %v1320, %v1417
    %v1479 = vadd.f32 %v1325, %v1422
    %v1480 = vadd.f32 %v1330, %v1427
    %v1481 = vadd.f32 %v1335, %v1432
    %v1482 = vadd.f32 %v1340, %v1437
    %v1483 = vadd.f32 %v1345, %v1442
    %v1484 = vadd.f32 %v1350, %v1447
    %v1485 = vadd.f32 %v1355, %v1452
    %v1486 = vadd.f32 %v1360, %v1457
    %v1487 = vadd.f32 %v1365, %v1462
    %v1488 = vadd.f32 %v1370, %v1467
    %v1489 = vadd.f32 %v1375, %v1472
    %vm1490 = vcmask 31744
    %v1491 = vsel %vm1490, %v1474, -inf
    %v1492 = vrot.slane %v1491, 4
    %v1493 = vmax.f32 %v1491, %v1492
    %v1494 = vrot.slane %v1493, 2
    %v1495 = vmax.f32 %v1493, %v1494
    %v1496 = vrot.slane %v1495, 1
    %v1497 = vmax.f32 %v1495, %v1496
    %v1498 = vsel %vm1490, %v1475, -inf
    %v1499 = vrot.slane %v1498, 4
    %v1500 = vmax.f32 %v1498, %v1499
    %v1501 = vrot.slane %v1500, 2
    %v1502 = vmax.f32 %v1500, %v1501
    %v1503 = vrot.slane %v1502, 1
    %v1504 = vmax.f32 %v1502, %v1503
    %v1505 = vsel %vm1490, %v1476, -inf
    %v1506 = vrot.slane %v1505, 4
    %v1507 = vmax.f32 %v1505, %v1506
    %v1508 = vrot.slane %v1507, 2
    %v1509 = vmax.f32 %v1507, %v1508
    %v1510 = vrot.slane %v1509, 1
    %v1511 = vmax.f32 %v1509, %v1510
    %v1512 = vsel %vm1490, %v1477, -inf
    %v1513 = vrot.slane %v1512, 4
    %v1514 = vmax.f32 %v1512, %v1513
    %v1515 = vrot.slane %v1514, 2
    %v1516 = vmax.f32 %v1514, %v1515
    %v1517 = vrot.slane %v1516, 1
    %v1518 = vmax.f32 %v1516, %v1517
    %v1519 = vsel %vm1490, %v1478, -inf
    %v1520 = vrot.slane %v1519, 4
    %v1521 = vmax.f32 %v1519, %v1520
    %v1522 = vrot.slane %v1521, 2
    %v1523 = vmax.f32 %v1521, %v1522
    %v1524 = vrot.slane %v1523, 1
    %v1525 = vmax.f32 %v1523, %v1524
    %v1526 = vsel %vm1490, %v1479, -inf
    %v1527 = vrot.slane %v1526, 4
    %v1528 = vmax.f32 %v1526, %v1527
    %v1529 = vrot.slane %v1528, 2
    %v1530 = vmax.f32 %v1528, %v1529
    %v1531 = vrot.slane %v1530, 1
    %v1532 = vmax.f32 %v1530, %v1531
    %v1533 = vsel %vm1490, %v1480, -inf
    %v1534 = vrot.slane %v1533, 4
    %v1535 = vmax.f32 %v1533, %v1534
    %v1536 = vrot.slane %v1535, 2
    %v1537 = vmax.f32 %v1535, %v1536
    %v1538 = vrot.slane %v1537, 1
    %v1539 = vmax.f32 %v1537, %v1538
    %v1540 = vsel %vm1490, %v1481, -inf
    %v1541 = vrot.slane %v1540, 4
    %v1542 = vmax.f32 %v1540, %v1541
    %v1543 = vrot.slane %v1542, 2
    %v1544 = vmax.f32 %v1542, %v1543
    %v1545 = vrot.slane %v1544, 1
    %v1546 = vmax.f32 %v1544, %v1545
    %v1547 = vsel %vm1490, %v1482, -inf
    %v1548 = vrot.slane %v1547, 4
    %v1549 = vmax.f32 %v1547, %v1548
    %v1550 = vrot.slane %v1549, 2
    %v1551 = vmax.f32 %v1549, %v1550
    %v1552 = vrot.slane %v1551, 1
    %v1553 = vmax.f32 %v1551, %v1552
    %v1554 = vsel %vm1490, %v1483, -inf
    %v1555 = vrot.slane %v1554, 4
    %v1556 = vmax.f32 %v1554, %v1555
    %v1557 = vrot.slane %v1556, 2
    %v1558 = vmax.f32 %v1556, %v1557
    %v1559 = vrot.slane %v1558, 1
    %v1560 = vmax.f32 %v1558, %v1559
    %v1561 = vsel %vm1490, %v1484, -inf
    %v1562 = vrot.slane %v1561, 4
    %v1563 = vmax.f32 %v1561, %v1562
    %v1564 = vrot.slane %v1563, 2
    %v1565 = vmax.f32 %v1563, %v1564
    %v1566 = vrot.slane %v1565, 1
    %v1567 = vmax.f32 %v1565, %v1566
    %v1568 = vsel %vm1490, %v1485, -inf
    %v1569 = vrot.slane %v1568, 4
    %v1570 = vmax.f32 %v1568, %v1569
    %v1571 = vrot.slane %v1570, 2
    %v1572 = vmax.f32 %v1570, %v1571
    %v1573 = vrot.slane %v1572, 1
    %v1574 = vmax.f32 %v1572, %v1573
    %v1575 = vsel %vm1490, %v1486, -inf
    %v1576 = vrot.slane %v1575, 4
    %v1577 = vmax.f32 %v1575, %v1576
    %v1578 = vrot.slane %v1577, 2
    %v1579 = vmax.f32 %v1577, %v1578
    %v1580 = vrot.slane %v1579, 1
    %v1581 = vmax.f32 %v1579, %v1580
    %v1582 = vsel %vm1490, %v1487, -inf
    %v1583 = vrot.slane %v1582, 4
    %v1584 = vmax.f32 %v1582, %v1583
    %v1585 = vrot.slane %v1584, 2
    %v1586 = vmax.f32 %v1584, %v1585
    %v1587 = vrot.slane %v1586, 1
    %v1588 = vmax.f32 %v1586, %v1587
    %v1589 = vsel %vm1490, %v1488, -inf
    %v1590 = vrot.slane %v1589, 4
    %v1591 = vmax.f32 %v1589, %v1590
    %v1592 = vrot.slane %v1591, 2
    %v1593 = vmax.f32 %v1591, %v1592
    %v1594 = vrot.slane %v1593, 1
    %v1595 = vmax.f32 %v1593, %v1594
    %v1596 = vsel %vm1490, %v1489, -inf
    %v1597 = vrot.slane %v1596, 4
    %v1598 = vmax.f32 %v1596, %v1597
    %v1599 = vrot.slane %v1598, 2
    %v1600 = vmax.f32 %v1598, %v1599
    %v1601 = vrot.slane %v1600, 1
    %v1602 = vmax.f32 %v1600, %v1601
    %v1603 = vsub.f32 %v1474, %v1497
    %v1604 = vsub.f32 %v1475, %v1504
    %v1605 = vsub.f32 %v1476, %v1511
    %v1606 = vsub.f32 %v1477, %v1518
    %v1607 = vsub.f32 %v1478, %v1525
    %v1608 = vsub.f32 %v1479, %v1532
    %v1609 = vsub.f32 %v1480, %v1539
    %v1610 = vsub.f32 %v1481, %v1546
    %v1611 = vsub.f32 %v1482, %v1553
    %v1612 = vsub.f32 %v1483, %v1560
    %v1613 = vsub.f32 %v1484, %v1567
    %v1614 = vsub.f32 %v1485, %v1574
    %v1615 = vsub.f32 %v1486, %v1581
    %v1616 = vsub.f32 %v1487, %v1588
    %v1617 = vsub.f32 %v1488, %v1595
    %v1618 = vsub.f32 %v1489, %v1602
    %v1619 = vmul.f32 %v1603, 1.442695
    %v1620 = vpow.pop %v1619
    %v1621 = vmul.f32 %v1604, 1.442695
    %v1622 = vpow.pop %v1621
    %v1623 = vmul.f32 %v1605, 1.442695
    %v1624 = vpow.pop %v1623
    %v1625 = vmul.f32 %v1606, 1.442695
    %v1626 = vpow.pop %v1625
    %v1627 = vmul.f32 %v1607, 1.442695
    %v1628 = vpow.pop %v1627
    %v1629 = vmul.f32 %v1608, 1.442695
    %v1630 = vpow.pop %v1629
    %v1631 = vmul.f32 %v1609, 1.442695
    %v1632 = vpow.pop %v1631
    %v1633 = vmul.f32 %v1610, 1.442695
    %v1634 = vpow.pop %v1633
    %v1635 = vmul.f32 %v1611, 1.442695
    %v1636 = vpow.pop %v1635
    %v1637 = vmul.f32 %v1612, 1.442695
    %v1638 = vpow.pop %v1637
    %v1639 = vmul.f32 %v1613, 1.442695
    %v1640 = vpow.pop %v1639
    %v1641 = vmul.f32 %v1614, 1.442695
    %v1642 = vpow.pop %v1641
    %v1643 = vmul.f32 %v1615, 1.442695
    %v1644 = vpow.pop %v1643
    %v1645 = vmul.f32 %v1616, 1.442695
    %v1646 = vpow.pop %v1645
    %v1647 = vmul.f32 %v1617, 1.442695
    %v1648 = vpow.pop %v1647
    %v1649 = vmul.f32 %v1618, 1.442695
    %v1650 = vpow.pop %v1649
    %v1651 = vsel %vm1490, %v1620, 0.0
    %v1652 = vrot.slane %v1651, 4
    %v1653 = vadd.f32 %v1651, %v1652
    %v1654 = vrot.slane %v1653, 2
    %v1655 = vadd.f32 %v1653, %v1654
    %v1656 = vrot.slane %v1655, 1
    %v1657 = vadd.f32 %v1655, %v1656
    %v1658 = vsel %vm1490, %v1622, 0.0
    %v1659 = vrot.slane %v1658, 4
    %v1660 = vadd.f32 %v1658, %v1659
    %v1661 = vrot.slane %v1660, 2
    %v1662 = vadd.f32 %v1660, %v1661
    %v1663 = vrot.slane %v1662, 1
    %v1664 = vadd.f32 %v1662, %v1663
    %v1665 = vsel %vm1490, %v1624, 0.0
    %v1666 = vrot.slane %v1665, 4
    %v1667 = vadd.f32 %v1665, %v1666
    %v1668 = vrot.slane %v1667, 2
    %v1669 = vadd.f32 %v1667, %v1668
    %v1670 = vrot.slane %v1669, 1
    %v1671 = vadd.f32 %v1669, %v1670
    %v1672 = vsel %vm1490, %v1626, 0.0
    %v1673 = vrot.slane %v1672, 4
    %v1674 = vadd.f32 %v1672, %v1673
    %v1675 = vrot.slane %v1674, 2
    %v1676 = vadd.f32 %v1674, %v1675
    %v1677 = vrot.slane %v1676, 1
    %v1678 = vadd.f32 %v1676, %v1677
    %v1679 = vsel %vm1490, %v1628, 0.0
    %v1680 = vrot.slane %v1679, 4
    %v1681 = vadd.f32 %v1679, %v1680
    %v1682 = vrot.slane %v1681, 2
    %v1683 = vadd.f32 %v1681, %v1682
    %v1684 = vrot.slane %v1683, 1
    %v1685 = vadd.f32 %v1683, %v1684
    %v1686 = vsel %vm1490, %v1630, 0.0
    %v1687 = vrot.slane %v1686, 4
    %v1688 = vadd.f32 %v1686, %v1687
    %v1689 = vrot.slane %v1688, 2
    %v1690 = vadd.f32 %v1688, %v1689
    %v1691 = vrot.slane %v1690, 1
    %v1692 = vadd.f32 %v1690, %v1691
    %v1693 = vsel %vm1490, %v1632, 0.0
    %v1694 = vrot.slane %v1693, 4
    %v1695 = vadd.f32 %v1693, %v1694
    %v1696 = vrot.slane %v1695, 2
    %v1697 = vadd.f32 %v1695, %v1696
    %v1698 = vrot.slane %v1697, 1
    %v1699 = vadd.f32 %v1697, %v1698
    %v1700 = vsel %vm1490, %v1634, 0.0
    %v1701 = vrot.slane %v1700, 4
    %v1702 = vadd.f32 %v1700, %v1701
    %v1703 = vrot.slane %v1702, 2
    %v1704 = vadd.f32 %v1702, %v1703
    %v1705 = vrot.slane %v1704, 1
    %v1706 = vadd.f32 %v1704, %v1705
    %v1707 = vsel %vm1490, %v1636, 0.0
    %v1708 = vrot.slane %v1707, 4
    %v1709 = vadd.f32 %v1707, %v1708
    %v1710 = vrot.slane %v1709, 2
    %v1711 = vadd.f32 %v1709, %v1710
    %v1712 = vrot.slane %v1711, 1
    %v1713 = vadd.f32 %v1711, %v1712
    %v1714 = vsel %vm1490, %v1638, 0.0
    %v1715 = vrot.slane %v1714, 4
    %v1716 = vadd.f32 %v1714, %v1715
    %v1717 = vrot.slane %v1716, 2
    %v1718 = vadd.f32 %v1716, %v1717
    %v1719 = vrot.slane %v1718, 1
    %v1720 = vadd.f32 %v1718, %v1719
    %v1721 = vsel %vm1490, %v1640, 0.0
    %v1722 = vrot.slane %v1721, 4
    %v1723 = vadd.f32 %v1721, %v1722
    %v1724 = vrot.slane %v1723, 2
    %v1725 = vadd.f32 %v1723, %v1724
    %v1726 = vrot.slane %v1725, 1
    %v1727 = vadd.f32 %v1725, %v1726
    %v1728 = vsel %vm1490, %v1642, 0.0
    %v1729 = vrot.slane %v1728, 4
    %v1730 = vadd.f32 %v1728, %v1729
    %v1731 = vrot.slane %v1730, 2
    %v1732 = vadd.f32 %v1730, %v1731
    %v1733 = vrot.slane %v1732, 1
    %v1734 = vadd.f32 %v1732, %v1733
    %v1735 = vsel %vm1490, %v1644, 0.0
    %v1736 = vrot.slane %v1735, 4
    %v1737 = vadd.f32 %v1735, %v1736
    %v1738 = vrot.slane %v1737, 2
    %v1739 = vadd.f32 %v1737, %v1738
    %v1740 = vrot.slane %v1739, 1
    %v1741 = vadd.f32 %v1739, %v1740
    %v1742 = vsel %vm1490, %v1646, 0.0
    %v1743 = vrot.slane %v1742, 4
    %v1744 = vadd.f32 %v1742, %v1743
    %v1745 = vrot.slane %v1744, 2
    %v1746 = vadd.f32 %v1744, %v1745
    %v1747 = vrot.slane %v1746, 1
    %v1748 = vadd.f32 %v1746, %v1747
    %v1749 = vsel %vm1490, %v1648, 0.0
    %v1750 = vrot.slane %v1749, 4
    %v1751 = vadd.f32 %v1749, %v1750
    %v1752 = vrot.slane %v1751, 2
    %v1753 = vadd.f32 %v1751, %v1752
    %v1754 = vrot.slane %v1753, 1
    %v1755 = vadd.f32 %v1753, %v1754
    %v1756 = vsel %vm1490, %v1650, 0.0
    %v1757 = vrot.slane %v1756, 4
    %v1758 = vadd.f32 %v1756, %v1757
    %v1759 = vrot.slane %v1758, 2
    %v1760 = vadd.f32 %v1758, %v1759
    %v1761 = vrot.slane %v1760, 1
    %v1762 = vadd.f32 %v1760, %v1761
    %v1763 = vrcp.pop %v1657
    %v1764 = vmul.f32 %v1620, %v1763
    %v1765 = vrcp.pop %v1664
    %v1766 = vmul.f32 %v1622, %v1765
    %v1767 = vrcp.pop %v1671
    %v1768 = vmul.f32 %v1624, %v1767
    %v1769 = vrcp.pop %v1678
    %v1770 = vmul.f32 %v1626, %v1769
    %v1771 = vrcp.pop %v1685
    %v1772 = vmul.f32 %v1628, %v1771
    %v1773 = vrcp.pop %v1692
    %v1774 = vmul.f32 %v1630, %v1773
    %v1775 = vrcp.pop %v1699
    %v1776 = vmul.f32 %v1632, %v1775
    %v1777 = vrcp.pop %v1706
    %v1778 = vmul.f32 %v1634, %v1777
    %v1779 = vrcp.pop %v1713
    %v1780 = vmul.f32 %v1636, %v1779
    %v1781 = vrcp.pop %v1720
    %v1782 = vmul.f32 %v1638, %v1781
    %v1783 = vrcp.pop %v1727
    %v1784 = vmul.f32 %v1640, %v1783
    %v1785 = vrcp.pop %v1734
    %v1786 = vmul.f32 %v1642, %v1785
    %v1787 = vrcp.pop %v1741
    %v1788 = vmul.f32 %v1644, %v1787
    %v1789 = vrcp.pop %v1748
    %v1790 = vmul.f32 %v1646, %v1789
    %v1791 = vrcp.pop %v1755
    %v1792 = vmul.f32 %v1648, %v1791
    %v1793 = vrcp.pop %v1762
    %v1794 = vmul.f32 %v1650, %v1793
    %v1795 = vmul.u32 %v699, 8
    %vm1796 = vcmp.ge.s32.totalorder %v1145, %v1795
    %v1797 = vadd.s32 %v699, 1
    %v1798 = vmul.u32 %v1797, 8
    %vm1799 = vcmp.lt.s32.totalorder %v1145, %v1798
    %vm1800 = vmand %vm1796, %vm1799
    %v1801 = vsel %vm1800, 1, 0
    %v1802 = vcvt.s32.f32 %v1801
    %v1804 = vsel %vm1490, %v1764, 0
    %v1807 = vsel %vm1490, %v1766, 0
    %v1810 = vsel %vm1490, %v1768, 0
    %v1813 = vsel %vm1490, %v1770, 0
    %v1816 = vsel %vm1490, %v1772, 0
    %v1819 = vsel %vm1490, %v1774, 0
    %v1822 = vsel %vm1490, %v1776, 0
    %v1825 = vsel %vm1490, %v1778, 0
    %v1828 = vsel %vm1490, %v1780, 0
    %v1831 = vsel %vm1490, %v1782, 0
    %v1834 = vsel %vm1490, %v1784, 0
    %v1837 = vsel %vm1490, %v1786, 0
    %v1840 = vsel %vm1490, %v1788, 0
    %v1843 = vsel %vm1490, %v1790, 0
    %v1846 = vsel %vm1490, %v1792, 0
    %v1849 = vsel %vm1490, %v1794, 0
    %vm1851 = vcmask 1043456
    %v1853 = vsel %vm1851, %v1802, 0
    %1855 = vmatprep.subr.mxu0 0.0
    %1856 = vmatpush1.msra.mxu0 0.0
    %1857 = vmatprep.subr.mxu0 0.0
    %1858 = vmatpush1.msra.mxu0 0.0
    %1859 = vmatprep.subr.mxu0 0.0
    %1860 = vmatpush1.msra.mxu0 0.0
    %1861 = vmatprep.subr.mxu0 0.0
    %1862 = vmatpush1.msra.mxu0 0.0
    %1863 = vmatprep.subr.mxu0 0.0
    %1864 = vmatpush1.msra.mxu0 0.0
    %1865 = vmatprep.subr.mxu0 0.0
    %1866 = vmatpush1.msra.mxu0 0.0
    %1867 = vmatprep.subr.mxu0 0.0
    %1868 = vmatpush1.msra.mxu0 0.0
    %1869 = vmatprep.subr.mxu0 0.0
    %1870 = vmatpush1.msra.mxu0 0.0
    %1871 = vmatprep.subr.mxu0 0.0
    %1872 = vmatpush1.msra.mxu0 0.0
    %1873 = vmatprep.subr.mxu0 0.0
    %1874 = vmatpush1.msra.mxu0 0.0
    %1875 = vmatprep.subr.mxu0 0.0
    %1876 = vmatpush1.msra.mxu0 0.0
    %1877 = vmatprep.subr.mxu0 0.0
    %1878 = vmatpush1.msra.mxu0 0.0
    %1879 = vmatprep.subr.mxu0 0.0
    %1880 = vmatpush1.msra.mxu0 0.0
    %1881 = vmatprep.subr.mxu0 0.0
    %1882 = vmatpush1.msra.mxu0 0.0
    %1883 = vmatprep.subr.mxu0 0.0
    %1884 = vmatpush1.msra.mxu0 0.0
    %1885 = vmatprep.subr.mxu0 0.0
    %1886 = vmatpush1.msra.mxu0 %v1853
    %1887 = vmatprep.subr.mxu0 0.0
    %1888 = vmatpush2.msra.mxu0 0.0
    %1889 = vmatprep.subr.mxu0 0.0
    %1890 = vmatpush2.msra.mxu0 0.0
    %1891 = vmatprep.subr.mxu0 0.0
    %1892 = vmatpush2.msra.mxu0 0.0
    %1893 = vmatprep.subr.mxu0 0.0
    %1894 = vmatpush2.msra.mxu0 0.0
    %1895 = vmatprep.subr.mxu0 0.0
    %1896 = vmatpush2.msra.mxu0 0.0
    %1897 = vmatprep.subr.mxu0 0.0
    %1898 = vmatpush2.msra.mxu0 0.0
    %1899 = vmatprep.subr.mxu0 0.0
    %1900 = vmatpush2.msra.mxu0 0.0
    %1901 = vmatprep.subr.mxu0 0.0
    %1902 = vmatpush2.msra.mxu0 0.0
    %1903 = vmatprep.subr.mxu0 0.0
    %1904 = vmatpush2.msra.mxu0 0.0
    %1905 = vmatprep.subr.mxu0 0.0
    %1906 = vmatpush2.msra.mxu0 0.0
    %1907 = vmatprep.subr.mxu0 0.0
    %1908 = vmatpush2.msra.mxu0 0.0
    %1909 = vmatprep.subr.mxu0 0.0
    %1910 = vmatpush2.msra.mxu0 0.0
    %1911 = vmatprep.subr.mxu0 0.0
    %1912 = vmatpush2.msra.mxu0 0.0
    %1913 = vmatprep.subr.mxu0 0.0
    %1914 = vmatpush2.msra.mxu0 0.0
    %1915 = vmatprep.subr.mxu0 0.0
    %1916 = vmatpush2.msra.mxu0 0.0
    %1917 = vmatprep.subr.mxu0 0.0
    %1918 = vmatpush2.msra.mxu0 0.0
    %1919 = vmatprep.mubr.f32.mxu0 0.0
    %1920 = vmatmul.mubr.f32.gmra.mxu0 %v1804
    %v1921 = vpop.f32.mrf.mxu0
    %v1922 = vadd.f32 0.0, %v1921
    %v1923 = vpop.f32.mrf.mxu0
    %1924 = vmatprep.mubr.f32.mxu0 0.0
    %1925 = vmatmul.mubr.f32.gmra.mxu0 %v1807
    %v1926 = vpop.f32.mrf.mxu0
    %v1927 = vadd.f32 0.0, %v1926
    %v1928 = vpop.f32.mrf.mxu0
    %1929 = vmatprep.mubr.f32.mxu0 0.0
    %1930 = vmatmul.mubr.f32.gmra.mxu0 %v1810
    %v1931 = vpop.f32.mrf.mxu0
    %v1932 = vadd.f32 0.0, %v1931
    %v1933 = vpop.f32.mrf.mxu0
    %1934 = vmatprep.mubr.f32.mxu0 0.0
    %1935 = vmatmul.mubr.f32.gmra.mxu0 %v1813
    %v1936 = vpop.f32.mrf.mxu0
    %v1937 = vadd.f32 0.0, %v1936
    %v1938 = vpop.f32.mrf.mxu0
    %1939 = vmatprep.mubr.f32.mxu0 0.0
    %1940 = vmatmul.mubr.f32.gmra.mxu0 %v1816
    %v1941 = vpop.f32.mrf.mxu0
    %v1942 = vadd.f32 0.0, %v1941
    %v1943 = vpop.f32.mrf.mxu0
    %1944 = vmatprep.mubr.f32.mxu0 0.0
    %1945 = vmatmul.mubr.f32.gmra.mxu0 %v1819
    %v1946 = vpop.f32.mrf.mxu0
    %v1947 = vadd.f32 0.0, %v1946
    %v1948 = vpop.f32.mrf.mxu0
    %1949 = vmatprep.mubr.f32.mxu0 0.0
    %1950 = vmatmul.mubr.f32.gmra.mxu0 %v1822
    %v1951 = vpop.f32.mrf.mxu0
    %v1952 = vadd.f32 0.0, %v1951
    %v1953 = vpop.f32.mrf.mxu0
    %1954 = vmatprep.mubr.f32.mxu0 0.0
    %1955 = vmatmul.mubr.f32.gmra.mxu0 %v1825
    %v1956 = vpop.f32.mrf.mxu0
    %v1957 = vadd.f32 0.0, %v1956
    %v1958 = vpop.f32.mrf.mxu0
    %1959 = vmatprep.mubr.f32.mxu0 0.0
    %1960 = vmatmul.mubr.f32.gmra.mxu0 %v1828
    %v1961 = vpop.f32.mrf.mxu0
    %v1962 = vadd.f32 0.0, %v1961
    %v1963 = vpop.f32.mrf.mxu0
    %1964 = vmatprep.mubr.f32.mxu0 0.0
    %1965 = vmatmul.mubr.f32.gmra.mxu0 %v1831
    %v1966 = vpop.f32.mrf.mxu0
    %v1967 = vadd.f32 0.0, %v1966
    %v1968 = vpop.f32.mrf.mxu0
    %1969 = vmatprep.mubr.f32.mxu0 0.0
    %1970 = vmatmul.mubr.f32.gmra.mxu0 %v1834
    %v1971 = vpop.f32.mrf.mxu0
    %v1972 = vadd.f32 0.0, %v1971
    %v1973 = vpop.f32.mrf.mxu0
    %1974 = vmatprep.mubr.f32.mxu0 0.0
    %1975 = vmatmul.mubr.f32.gmra.mxu0 %v1837
    %v1976 = vpop.f32.mrf.mxu0
    %v1977 = vadd.f32 0.0, %v1976
    %v1978 = vpop.f32.mrf.mxu0
    %1979 = vmatprep.mubr.f32.mxu0 0.0
    %1980 = vmatmul.mubr.f32.gmra.mxu0 %v1840
    %v1981 = vpop.f32.mrf.mxu0
    %v1982 = vadd.f32 0.0, %v1981
    %v1983 = vpop.f32.mrf.mxu0
    %1984 = vmatprep.mubr.f32.mxu0 0.0
    %1985 = vmatmul.mubr.f32.gmra.mxu0 %v1843
    %v1986 = vpop.f32.mrf.mxu0
    %v1987 = vadd.f32 0.0, %v1986
    %v1988 = vpop.f32.mrf.mxu0
    %1989 = vmatprep.mubr.f32.mxu0 0.0
    %1990 = vmatmul.mubr.f32.gmra.mxu0 %v1846
    %v1991 = vpop.f32.mrf.mxu0
    %v1992 = vadd.f32 0.0, %v1991
    %v1993 = vpop.f32.mrf.mxu0
    %1994 = vmatprep.mubr.f32.mxu0 0.0
    %1995 = vmatmul.mubr.f32.gmra.mxu0 %v1849
    %v1996 = vpop.f32.mrf.mxu0
    %v1997 = vadd.f32 0.0, %v1996
    %v1998 = vpop.f32.mrf.mxu0
    %1999 = vdwg.mxu0
    %2016 = vrot.lane.b32.xlu0 %v838, 96
    %v2017 = vpop.permute.xlu0 %2016
    %2018 = vrot.lane.b32.xlu0 %v841, 96
    %v2019 = vpop.permute.xlu0 %2018
    %2020 = vrot.lane.b32.xlu0 %v846, 96
    %v2021 = vpop.permute.xlu0 %2020
    %2022 = vrot.lane.b32.xlu0 %v849, 96
    %v2023 = vpop.permute.xlu0 %2022
    %2024 = vrot.lane.b32.xlu0 %v854, 96
    %v2025 = vpop.permute.xlu0 %2024
    %2026 = vrot.lane.b32.xlu0 %v857, 96
    %v2027 = vpop.permute.xlu0 %2026
    %2028 = vrot.lane.b32.xlu0 %v862, 96
    %v2029 = vpop.permute.xlu0 %2028
    %2030 = vrot.lane.b32.xlu0 %v865, 96
    %v2031 = vpop.permute.xlu0 %2030
    %2032 = vrot.lane.b32.xlu0 %v870, 96
    %v2033 = vpop.permute.xlu0 %2032
    %2034 = vrot.lane.b32.xlu0 %v873, 96
    %v2035 = vpop.permute.xlu0 %2034
    %2036 = vrot.lane.b32.xlu0 %v878, 96
    %v2037 = vpop.permute.xlu0 %2036
    %2038 = vrot.lane.b32.xlu0 %v881, 96
    %v2039 = vpop.permute.xlu0 %2038
    %2040 = vrot.lane.b32.xlu0 %v886, 96
    %v2041 = vpop.permute.xlu0 %2040
    %2042 = vrot.lane.b32.xlu0 %v889, 96
    %v2043 = vpop.permute.xlu0 %2042
    %2044 = vrot.lane.b32.xlu0 %v894, 96
    %v2045 = vpop.permute.xlu0 %2044
    %2046 = vrot.lane.b32.xlu0 %v897, 96
    %v2047 = vpop.permute.xlu0 %2046
    %v2064 = vmul.f32 %v1922, %v2017
    %v2065 = vmul.f32 %v1927, %v2019
    %v2066 = vmul.f32 %v1932, %v2021
    %v2067 = vmul.f32 %v1937, %v2023
    %v2068 = vmul.f32 %v1942, %v2025
    %v2069 = vmul.f32 %v1947, %v2027
    %v2070 = vmul.f32 %v1952, %v2029
    %v2071 = vmul.f32 %v1957, %v2031
    %v2072 = vmul.f32 %v1962, %v2033
    %v2073 = vmul.f32 %v1967, %v2035
    %v2074 = vmul.f32 %v1972, %v2037
    %v2075 = vmul.f32 %v1977, %v2039
    %v2076 = vmul.f32 %v1982, %v2041
    %v2077 = vmul.f32 %v1987, %v2043
    %v2078 = vmul.f32 %v1992, %v2045
    %v2079 = vmul.f32 %v1997, %v2047
    %v2080 = vsel %vm170, %v2064, 0.0
    %v2081 = vrot.slane %v2080, 4
    %v2082 = vadd.f32 %v2080, %v2081
    %v2083 = vrot.slane %v2082, 2
    %v2084 = vadd.f32 %v2082, %v2083
    %v2085 = vrot.slane %v2084, 1
    %v2086 = vadd.f32 %v2084, %v2085
    %v2087 = vsel %vm170, %v2065, 0.0
    %v2088 = vrot.slane %v2087, 4
    %v2089 = vadd.f32 %v2087, %v2088
    %v2090 = vrot.slane %v2089, 2
    %v2091 = vadd.f32 %v2089, %v2090
    %v2092 = vrot.slane %v2091, 1
    %v2093 = vadd.f32 %v2091, %v2092
    %v2094 = vsel %vm170, %v2066, 0.0
    %v2095 = vrot.slane %v2094, 4
    %v2096 = vadd.f32 %v2094, %v2095
    %v2097 = vrot.slane %v2096, 2
    %v2098 = vadd.f32 %v2096, %v2097
    %v2099 = vrot.slane %v2098, 1
    %v2100 = vadd.f32 %v2098, %v2099
    %v2101 = vsel %vm170, %v2067, 0.0
    %v2102 = vrot.slane %v2101, 4
    %v2103 = vadd.f32 %v2101, %v2102
    %v2104 = vrot.slane %v2103, 2
    %v2105 = vadd.f32 %v2103, %v2104
    %v2106 = vrot.slane %v2105, 1
    %v2107 = vadd.f32 %v2105, %v2106
    %v2108 = vsel %vm170, %v2068, 0.0
    %v2109 = vrot.slane %v2108, 4
    %v2110 = vadd.f32 %v2108, %v2109
    %v2111 = vrot.slane %v2110, 2
    %v2112 = vadd.f32 %v2110, %v2111
    %v2113 = vrot.slane %v2112, 1
    %v2114 = vadd.f32 %v2112, %v2113
    %v2115 = vsel %vm170, %v2069, 0.0
    %v2116 = vrot.slane %v2115, 4
    %v2117 = vadd.f32 %v2115, %v2116
    %v2118 = vrot.slane %v2117, 2
    %v2119 = vadd.f32 %v2117, %v2118
    %v2120 = vrot.slane %v2119, 1
    %v2121 = vadd.f32 %v2119, %v2120
    %v2122 = vsel %vm170, %v2070, 0.0
    %v2123 = vrot.slane %v2122, 4
    %v2124 = vadd.f32 %v2122, %v2123
    %v2125 = vrot.slane %v2124, 2
    %v2126 = vadd.f32 %v2124, %v2125
    %v2127 = vrot.slane %v2126, 1
    %v2128 = vadd.f32 %v2126, %v2127
    %v2129 = vsel %vm170, %v2071, 0.0
    %v2130 = vrot.slane %v2129, 4
    %v2131 = vadd.f32 %v2129, %v2130
    %v2132 = vrot.slane %v2131, 2
    %v2133 = vadd.f32 %v2131, %v2132
    %v2134 = vrot.slane %v2133, 1
    %v2135 = vadd.f32 %v2133, %v2134
    %v2136 = vsel %vm170, %v2072, 0.0
    %v2137 = vrot.slane %v2136, 4
    %v2138 = vadd.f32 %v2136, %v2137
    %v2139 = vrot.slane %v2138, 2
    %v2140 = vadd.f32 %v2138, %v2139
    %v2141 = vrot.slane %v2140, 1
    %v2142 = vadd.f32 %v2140, %v2141
    %v2143 = vsel %vm170, %v2073, 0.0
    %v2144 = vrot.slane %v2143, 4
    %v2145 = vadd.f32 %v2143, %v2144
    %v2146 = vrot.slane %v2145, 2
    %v2147 = vadd.f32 %v2145, %v2146
    %v2148 = vrot.slane %v2147, 1
    %v2149 = vadd.f32 %v2147, %v2148
    %v2150 = vsel %vm170, %v2074, 0.0
    %v2151 = vrot.slane %v2150, 4
    %v2152 = vadd.f32 %v2150, %v2151
    %v2153 = vrot.slane %v2152, 2
    %v2154 = vadd.f32 %v2152, %v2153
    %v2155 = vrot.slane %v2154, 1
    %v2156 = vadd.f32 %v2154, %v2155
    %v2157 = vsel %vm170, %v2075, 0.0
    %v2158 = vrot.slane %v2157, 4
    %v2159 = vadd.f32 %v2157, %v2158
    %v2160 = vrot.slane %v2159, 2
    %v2161 = vadd.f32 %v2159, %v2160
    %v2162 = vrot.slane %v2161, 1
    %v2163 = vadd.f32 %v2161, %v2162
    %v2164 = vsel %vm170, %v2076, 0.0
    %v2165 = vrot.slane %v2164, 4
    %v2166 = vadd.f32 %v2164, %v2165
    %v2167 = vrot.slane %v2166, 2
    %v2168 = vadd.f32 %v2166, %v2167
    %v2169 = vrot.slane %v2168, 1
    %v2170 = vadd.f32 %v2168, %v2169
    %v2171 = vsel %vm170, %v2077, 0.0
    %v2172 = vrot.slane %v2171, 4
    %v2173 = vadd.f32 %v2171, %v2172
    %v2174 = vrot.slane %v2173, 2
    %v2175 = vadd.f32 %v2173, %v2174
    %v2176 = vrot.slane %v2175, 1
    %v2177 = vadd.f32 %v2175, %v2176
    %v2178 = vsel %vm170, %v2078, 0.0
    %v2179 = vrot.slane %v2178, 4
    %v2180 = vadd.f32 %v2178, %v2179
    %v2181 = vrot.slane %v2180, 2
    %v2182 = vadd.f32 %v2180, %v2181
    %v2183 = vrot.slane %v2182, 1
    %v2184 = vadd.f32 %v2182, %v2183
    %v2185 = vsel %vm170, %v2079, 0.0
    %v2186 = vrot.slane %v2185, 4
    %v2187 = vadd.f32 %v2185, %v2186
    %v2188 = vrot.slane %v2187, 2
    %v2189 = vadd.f32 %v2187, %v2188
    %v2190 = vrot.slane %v2189, 1
    %v2191 = vadd.f32 %v2189, %v2190
    %v2192 = vpack.c.bf16 %v2086, %v2086
    %v2193 = vpack.c.bf16 %v2093, %v2093
    %v2194 = vpack.c.bf16 %v2100, %v2100
    %v2195 = vpack.c.bf16 %v2107, %v2107
    %v2196 = vpack.c.bf16 %v2114, %v2114
    %v2197 = vpack.c.bf16 %v2121, %v2121
    %v2198 = vpack.c.bf16 %v2128, %v2128
    %v2199 = vpack.c.bf16 %v2135, %v2135
    %v2200 = vpack.c.bf16 %v2142, %v2142
    %v2201 = vpack.c.bf16 %v2149, %v2149
    %v2202 = vpack.c.bf16 %v2156, %v2156
    %v2203 = vpack.c.bf16 %v2163, %v2163
    %v2204 = vpack.c.bf16 %v2170, %v2170
    %v2205 = vpack.c.bf16 %v2177, %v2177
    %v2206 = vpack.c.bf16 %v2184, %v2184
    %v2207 = vpack.c.bf16 %v2191, %v2191
    %v2208 = vld [vmem:[%s4 + $0x60] sm:$0xf]
    %v2209 = vld [vmem:[%s4 + $0x64] sm:$0xf]
    %v2210 = vld [vmem:[%s4 + $0x68] sm:$0xf]
    %v2211 = vld [vmem:[%s4 + $0x6c] sm:$0xf]
    %v2228 = vunpack.c.l.b16 %v2192
    %v2229 = vunpack.c.l.b16 %v2193
    %v2230 = vunpack.c.l.b16 %v2194
    %v2231 = vunpack.c.l.b16 %v2195
    %v2232 = vunpack.c.l.b16 %v2196
    %v2233 = vunpack.c.l.b16 %v2197
    %v2234 = vunpack.c.l.b16 %v2198
    %v2235 = vunpack.c.l.b16 %v2199
    %v2236 = vunpack.c.l.b16 %v2200
    %v2237 = vunpack.c.l.b16 %v2201
    %v2238 = vunpack.c.l.b16 %v2202
    %v2239 = vunpack.c.l.b16 %v2203
    %v2240 = vunpack.c.l.b16 %v2204
    %v2241 = vunpack.c.l.b16 %v2205
    %v2242 = vunpack.c.l.b16 %v2206
    %v2243 = vunpack.c.l.b16 %v2207
    %vm2244 = vcmask 1041409
    %v2245 = vsel %vm2244, %v2229, %v2228
    %vm2246 = vcmask 1042434
    %v2247 = vsel %vm2246, %v2230, %v2245
    %vm2248 = vcmask 1043459
    %v2249 = vsel %vm2248, %v2231, %v2247
    %vm2250 = vcmask 1044484
    %v2251 = vsel %vm2250, %v2232, %v2249
    %vm2252 = vcmask 1045509
    %v2253 = vsel %vm2252, %v2233, %v2251
    %vm2254 = vcmask 1046534
    %v2255 = vsel %vm2254, %v2234, %v2253
    %vm2256 = vcmask 1047559
    %v2257 = vsel %vm2256, %v2235, %v2255
    %v2258 = vsel %vm2244, %v2237, %v2236
    %v2259 = vsel %vm2246, %v2238, %v2258
    %v2260 = vsel %vm2248, %v2239, %v2259
    %v2261 = vsel %vm2250, %v2240, %v2260
    %v2262 = vsel %vm2252, %v2241, %v2261
    %v2263 = vsel %vm2254, %v2242, %v2262
    %v2264 = vsel %vm2256, %v2243, %v2263
    %v2265 = vpack.c.b16 %v2264, %v2257
    %v2270 = vunpack.c.l.b16 %v2208
    %v2271 = vunpack.c.l.b16 %v2209
    %v2272 = vunpack.c.l.b16 %v2210
    %v2273 = vunpack.c.l.b16 %v2211
    %v2274 = vpack.c.b16 %v2271, %v2270
    %v2275 = vpack.c.b16 %v2273, %v2272
    %v2279 = vsel %vm170, %v2265, 0
    %2281 = vmatprep.subr.bf16.mxu0 0
    %2282 = vmatpush1.bf16.msra.mxu0 0
    %2283 = vmatprep.subr.bf16.mxu0 0
    %2284 = vmatpush1.bf16.msra.mxu0 0
    %2285 = vmatprep.subr.bf16.mxu0 0
    %2286 = vmatpush1.bf16.msra.mxu0 0
    %2287 = vmatprep.subr.bf16.mxu0 0
    %2288 = vmatpush1.bf16.msra.mxu0 0
    %2289 = vmatprep.subr.bf16.mxu0 0
    %2290 = vmatpush1.bf16.msra.mxu0 0
    %2291 = vmatprep.subr.bf16.mxu0 0
    %2292 = vmatpush1.bf16.msra.mxu0 0
    %2293 = vmatprep.subr.bf16.mxu0 0
    %2294 = vmatpush1.bf16.msra.mxu0 %v2275
    %2295 = vmatprep.subr.bf16.mxu0 0
    %2296 = vmatpush1.bf16.msra.mxu0 %v2274
    %2297 = vmatprep.subr.bf16.mxu0 0
    %2298 = vmatpush2.bf16.msra.mxu0 0
    %2299 = vmatprep.subr.bf16.mxu0 0
    %2300 = vmatpush2.bf16.msra.mxu0 0
    %2301 = vmatprep.subr.bf16.mxu0 0
    %2302 = vmatpush2.bf16.msra.mxu0 0
    %2303 = vmatprep.subr.bf16.mxu0 0
    %2304 = vmatpush2.bf16.msra.mxu0 0
    %2305 = vmatprep.subr.bf16.mxu0 0
    %2306 = vmatpush2.bf16.msra.mxu0 0
    %2307 = vmatprep.subr.bf16.mxu0 0
    %2308 = vmatpush2.bf16.msra.mxu0 0
    %2309 = vmatprep.subr.bf16.mxu0 0
    %2310 = vmatpush2.bf16.msra.mxu0 0
    %2311 = vmatprep.subr.bf16.mxu0 0
    %2312 = vmatpush2.bf16.msra.mxu0 0
    %2313 = vmatprep.mubr.bf16.mxu0 0
    %2314 = vmatmul.mubr.bf16.gmra.mxu0 %v2279
    %v2315 = vpop.f32.mrf.mxu0
    %v2316 = vadd.f32 0.0, %v2315
    %v2317 = vpop.f32.mrf.mxu0
    %v2318 = vpop.f32.mrf.mxu0
    %v2319 = vadd.f32 0.0, %v2318
    %v2320 = vpop.f32.mrf.mxu0
    %2321 = vdwg.mxu0
    %v2322 = vadd.f32 %v722, %v2316
    %v2323 = vadd.f32 %v722, %v2319
    %v2324 = vld [vmem:[%s5 + $0x6] sm:$0x1]
    %v2325 = vld [vmem:[%s5 + $0x7] sm:$0x1]
    %v2326 = vsel %vm170, %v2322, 0.0
    %2327 = vadd.xlane.f32.xlu0 %v2326
    %v2328 = vpop.xlane.xlu0 %2327
    %v2329 = vsel %vm170, %v2323, 0.0
    %2330 = vadd.xlane.f32.xlu0 %v2329
    %v2331 = vpop.xlane.xlu0 %2330
    %v2332 = vrcp.pop 32.0
    %v2333 = vmul.f32 %v2328, %v2332
    %v2334 = vmul.f32 %v2331, %v2332
    %v2335 = vsub.f32 %v2322, %v2333
    %v2336 = vsub.f32 %v2323, %v2334
    %v2337 = vmul.f32 %v2335, %v2335
    %v2338 = vmul.f32 %v2336, %v2336
    %v2339 = vsel %vm170, %v2337, 0.0
    %2340 = vadd.xlane.f32.xlu0 %v2339
    %v2341 = vpop.xlane.xlu0 %2340
    %v2342 = vsel %vm170, %v2338, 0.0
    %2343 = vadd.xlane.f32.xlu0 %v2342
    %v2344 = vpop.xlane.xlu0 %2343
    %v2345 = vmul.f32 %v2341, %v2332
    %v2346 = vmul.f32 %v2344, %v2332
    %v2347 = vadd.f32 %v2345, 1e-06
    %v2348 = vadd.f32 %v2346, 1e-06
    %v2349 = vrsqrt.pop %v2347
    %v2350 = vrsqrt.pop %v2348
    %v2351 = vmul.f32 %v2335, %v2349
    %v2352 = vmul.f32 %v2336, %v2350
    %v2353 = vlaneseq
    %v2354 = vshrl.u32 %v2353, 7
    %v2355 = vsub.s32 0, %v2354
    %v2356 = vrot.slane %v2324, %v2355
    %v2357 = vmul.f32 %v2351, %v2356
    %v2358 = vmul.f32 %v2352, %v2356
    %v2359 = vlaneseq
    %v2360 = vshrl.u32 %v2359, 7
    %v2361 = vsub.s32 0, %v2360
    %v2362 = vrot.slane %v2325, %v2361
    %v2363 = vadd.f32 %v2357, %v2362
    %v2364 = vadd.f32 %v2358, %v2362
    %v2365 = vpack.c.bf16 %v2364, %v2363
    %v2366 = vld [vmem:[%s4 + $0x70] sm:$0xf]
    %v2367 = vld [vmem:[%s4 + $0x74] sm:$0xf]
    %v2368 = vld [vmem:[%s4 + $0x78] sm:$0xf]
    %v2369 = vld [vmem:[%s4 + $0x7c] sm:$0xf]
    %v2370 = vld [vmem:[%s5 + $0x8] sm:$0x1]
    %v2371 = vlaneseq
    %v2372 = vshrl.u32 %v2371, 7
    %v2373 = vsub.s32 0, %v2372
    %v2374 = vrot.slane %v2370, %v2373
    %v2379 = vunpack.c.l.b16 %v2366
    %v2380 = vunpack.c.l.b16 %v2367
    %v2381 = vunpack.c.l.b16 %v2368
    %v2382 = vunpack.c.l.b16 %v2369
    %v2383 = vpack.c.b16 %v2380, %v2379
    %v2384 = vpack.c.b16 %v2382, %v2381
    %v2388 = vsel %vm170, %v2365, 0
    %2390 = vmatprep.subr.bf16.mxu0 0
    %2391 = vmatpush1.bf16.msra.mxu0 0
    %2392 = vmatprep.subr.bf16.mxu0 0
    %2393 = vmatpush1.bf16.msra.mxu0 0
    %2394 = vmatprep.subr.bf16.mxu0 0
    %2395 = vmatpush1.bf16.msra.mxu0 0
    %2396 = vmatprep.subr.bf16.mxu0 0
    %2397 = vmatpush1.bf16.msra.mxu0 0
    %2398 = vmatprep.subr.bf16.mxu0 0
    %2399 = vmatpush1.bf16.msra.mxu0 0
    %2400 = vmatprep.subr.bf16.mxu0 0
    %2401 = vmatpush1.bf16.msra.mxu0 0
    %2402 = vmatprep.subr.bf16.mxu0 0
    %2403 = vmatpush1.bf16.msra.mxu0 %v2384
    %2404 = vmatprep.subr.bf16.mxu0 0
    %2405 = vmatpush1.bf16.msra.mxu0 %v2383
    %2406 = vmatprep.subr.bf16.mxu0 0
    %2407 = vmatpush2.bf16.msra.mxu0 0
    %2408 = vmatprep.subr.bf16.mxu0 0
    %2409 = vmatpush2.bf16.msra.mxu0 0
    %2410 = vmatprep.subr.bf16.mxu0 0
    %2411 = vmatpush2.bf16.msra.mxu0 0
    %2412 = vmatprep.subr.bf16.mxu0 0
    %2413 = vmatpush2.bf16.msra.mxu0 0
    %2414 = vmatprep.subr.bf16.mxu0 0
    %2415 = vmatpush2.bf16.msra.mxu0 0
    %2416 = vmatprep.subr.bf16.mxu0 0
    %2417 = vmatpush2.bf16.msra.mxu0 0
    %2418 = vmatprep.subr.bf16.mxu0 0
    %2419 = vmatpush2.bf16.msra.mxu0 0
    %2420 = vmatprep.subr.bf16.mxu0 0
    %2421 = vmatpush2.bf16.msra.mxu0 0
    %2422 = vmatprep.mubr.bf16.mxu0 0
    %2423 = vmatmul.mubr.bf16.gmra.mxu0 %v2388
    %v2424 = vpop.f32.mrf.mxu0
    %v2425 = vadd.f32 %v2374, %v2424
    %v2426 = vpop.f32.mrf.mxu0
    %v2427 = vpop.f32.mrf.mxu0
    %v2428 = vadd.f32 %v2374, %v2427
    %v2429 = vpop.f32.mrf.mxu0
    %2430 = vdwg.mxu0
    %v2431 = vmax.f32 %v2425, 0.0
    %v2432 = vmax.f32 %v2428, 0.0
    %v2433 = vpack.c.bf16 %v2432, %v2431
    %v2434 = vld [vmem:[%s4 + $0x80] sm:$0xf]
    %v2435 = vld [vmem:[%s4 + $0x84] sm:$0xf]
    %v2436 = vld [vmem:[%s4 + $0x88] sm:$0xf]
    %v2437 = vld [vmem:[%s4 + $0x8c] sm:$0xf]
    %v2438 = vld [vmem:[%s4 + $0x90] sm:$0xf]
    %v2439 = vld [vmem:[%s4 + $0x94] sm:$0xf]
    %v2440 = vld [vmem:[%s4 + $0x98] sm:$0xf]
    %v2441 = vld [vmem:[%s4 + $0x9c] sm:$0xf]
    %v2442 = vld [vmem:[%s5 + $0x9] sm:$0x1]
    %v2443 = vlaneseq
    %v2444 = vshrl.u32 %v2443, 7
    %v2445 = vsub.s32 0, %v2444
    %v2446 = vrot.slane %v2442, %v2445
    %v2455 = vunpack.c.l.b16 %v2434
    %v2456 = vunpack.c.l.b16 %v2435
    %v2457 = vunpack.c.l.b16 %v2436
    %v2458 = vunpack.c.l.b16 %v2437
    %v2459 = vunpack.c.l.b16 %v2438
    %v2460 = vunpack.c.l.b16 %v2439
    %v2461 = vunpack.c.l.b16 %v2440
    %v2462 = vunpack.c.l.b16 %v2441
    %v2463 = vpack.c.b16 %v2456, %v2455
    %v2464 = vpack.c.b16 %v2458, %v2457
    %v2465 = vpack.c.b16 %v2460, %v2459
    %v2466 = vpack.c.b16 %v2462, %v2461
    %vm2471 = vcmask 523264
    %v2473 = vsel %vm2471, %v2433, 0
    %2475 = vmatprep.subr.bf16.mxu0 0
    %2476 = vmatpush1.bf16.msra.mxu0 0
    %2477 = vmatprep.subr.bf16.mxu0 0
    %2478 = vmatpush1.bf16.msra.mxu0 0
    %2479 = vmatprep.subr.bf16.mxu0 0
    %2480 = vmatpush1.bf16.msra.mxu0 0
    %2481 = vmatprep.subr.bf16.mxu0 0
    %2482 = vmatpush1.bf16.msra.mxu0 0
    %2483 = vmatprep.subr.bf16.mxu0 0
    %2484 = vmatpush1.bf16.msra.mxu0 %v2466
    %2485 = vmatprep.subr.bf16.mxu0 0
    %2486 = vmatpush1.bf16.msra.mxu0 %v2465
    %2487 = vmatprep.subr.bf16.mxu0 0
    %2488 = vmatpush1.bf16.msra.mxu0 %v2464
    %2489 = vmatprep.subr.bf16.mxu0 0
    %2490 = vmatpush1.bf16.msra.mxu0 %v2463
    %2491 = vmatprep.subr.bf16.mxu0 0
    %2492 = vmatpush2.bf16.msra.mxu0 0
    %2493 = vmatprep.subr.bf16.mxu0 0
    %2494 = vmatpush2.bf16.msra.mxu0 0
    %2495 = vmatprep.subr.bf16.mxu0 0
    %2496 = vmatpush2.bf16.msra.mxu0 0
    %2497 = vmatprep.subr.bf16.mxu0 0
    %2498 = vmatpush2.bf16.msra.mxu0 0
    %2499 = vmatprep.subr.bf16.mxu0 0
    %2500 = vmatpush2.bf16.msra.mxu0 0
    %2501 = vmatprep.subr.bf16.mxu0 0
    %2502 = vmatpush2.bf16.msra.mxu0 0
    %2503 = vmatprep.subr.bf16.mxu0 0
    %2504 = vmatpush2.bf16.msra.mxu0 0
    %2505 = vmatprep.subr.bf16.mxu0 0
    %2506 = vmatpush2.bf16.msra.mxu0 0
    %2507 = vmatprep.mubr.bf16.mxu0 0
    %2508 = vmatmul.mubr.bf16.gmra.mxu0 %v2473
    %v2509 = vpop.f32.mrf.mxu0
    %v2510 = vadd.f32 %v2446, %v2509
    %v2511 = vpop.f32.mrf.mxu0
    %v2512 = vpop.f32.mrf.mxu0
    %v2513 = vadd.f32 %v2446, %v2512
    %v2514 = vpop.f32.mrf.mxu0
    %2515 = vdwg.mxu0
    %v2516 = vadd.f32 %v2510, %v2363
    %v2517 = vadd.f32 %v2513, %v2364
    %v2518 = vld [vmem:[%s5 + $0xa] sm:$0x1]
    %v2519 = vld [vmem:[%s5 + $0xb] sm:$0x1]
    %v2520 = vsel %vm170, %v2516, 0.0
    %2521 = vadd.xlane.f32.xlu0 %v2520
    %v2522 = vpop.xlane.xlu0 %2521
    %v2523 = vsel %vm170, %v2517, 0.0
    %2524 = vadd.xlane.f32.xlu0 %v2523
    %v2525 = vpop.xlane.xlu0 %2524
    %v2526 = vmul.f32 %v2522, %v2332
    %v2527 = vmul.f32 %v2525, %v2332
    %v2528 = vsub.f32 %v2516, %v2526
    %v2529 = vsub.f32 %v2517, %v2527
    %v2530 = vmul.f32 %v2528, %v2528
    %v2531 = vmul.f32 %v2529, %v2529
    %v2532 = vsel %vm170, %v2530, 0.0
    %2533 = vadd.xlane.f32.xlu0 %v2532
    %v2534 = vpop.xlane.xlu0 %2533
    %v2535 = vsel %vm170, %v2531, 0.0
    %2536 = vadd.xlane.f32.xlu0 %v2535
    %v2537 = vpop.xlane.xlu0 %2536
    %v2538 = vmul.f32 %v2534, %v2332
    %v2539 = vmul.f32 %v2537, %v2332
    %v2540 = vadd.f32 %v2538, 1e-06
    %v2541 = vadd.f32 %v2539, 1e-06
    %v2542 = vrsqrt.pop %v2540
    %v2543 = vrsqrt.pop %v2541
    %v2544 = vmul.f32 %v2528, %v2542
    %v2545 = vmul.f32 %v2529, %v2543
    %v2546 = vlaneseq
    %v2547 = vshrl.u32 %v2546, 7
    %v2548 = vsub.s32 0, %v2547
    %v2549 = vrot.slane %v2518, %v2548
    %v2550 = vmul.f32 %v2544, %v2549
    %v2551 = vmul.f32 %v2545, %v2549
    %v2552 = vlaneseq
    %v2553 = vshrl.u32 %v2552, 7
    %v2554 = vsub.s32 0, %v2553
    %v2555 = vrot.slane %v2519, %v2554
    %v2556 = vadd.f32 %v2550, %v2555
    %v2557 = vadd.f32 %v2551, %v2555
    %v2558 = vadd.f32 %v209, %v2556
    %v2559 = vadd.f32 %v212, %v2557
    %2560 = vst.msk [vmem:[#allocation2] sm:$0xff] %vm170, %v2558
    %2561 = vst.msk [vmem:[#allocation2 + $0x8] sm:$0xff] %vm170, %v2559
    // Predicated region
    $region26: #{tpu_custom_call.1} parent=1 // pred_check
      _
    $region27: #{tpu_custom_call.1} parent=1 // pred_check_branch
      %2563 = sbr.rel (0) target = $region29
    $region28: #{tpu_custom_call.1} parent=1 // pred_region
      %s2565 = ssub.s32 256, 256
      %2566 = vsyncadd [#allocation3], %s2565
      %s2567 = sshll.u32 [#allocation2], 4
      %s2568 = int_to_ptr.vmem [resolvable:$true] %s2567
      %2573 = dma.vmem_to_hbm [thread:$0]  %s2568, 256, %s6, [#allocation3], 128, 128, 8
    $region29: #{tpu_custom_call.1} parent=1 // pred_fallthru
      _
    // Predicated region
    $region30: #{tpu_custom_call.1} parent=1 // pred_check
      _
    $region31: #{tpu_custom_call.1} parent=1 // pred_check_branch
      %2575 = sbr.rel (0) target = $region33
    $region32: #{tpu_custom_call.1} parent=1 // pred_region
      %2576 = dma.done [#allocation3], 256
    $region33: #{tpu_custom_call.1} parent=1 // pred_fallthru
      _
    %2577 = vsyncpa [#allocation3], 1

</llo_original>
